<compile_context>
chip_gen: v7x
topology: tpu7x:2x2x1
jax: 0.10.0
libtpu: 0.0.40
codegen_flags: <defaults>
</compile_context>

<pallas_src>
import math

import jax
import jax.numpy as jnp
from jax import lax
from jax.experimental import pallas as pl
from jax.experimental.pallas import tpu as pltpu

INPUT_SIZE = 10
HIDDEN_SIZE = 12
NUM_LAYERS = 2
OUTPUT_SIZE = 1

GP = 32                  # per-gate lane offset stride inside the packed tile
GATE_TILE = 128          # packed gate axis: ONE 128-lane tile for all 4 gates

# Lane offsets inside the packed output slab (single lane-dense writeback).
SLAB_LANES = 128
OFF_OUT = 0
OFF_HN0 = 16
OFF_HN1 = 32
OFF_CN0 = 48
OFF_CN1 = 64


# --------------------------------------------------------------------------
# Fused Pallas kernel: layer-1 + layer-2 wavefront recurrence + linear head
# --------------------------------------------------------------------------
def _fused_lstm_kernel(x_ref, w1_ref, u1_ref, b1_ref,
                       w2_ref, u2_ref, b2_ref,
                       wl_ref, bl_ref, h0_ref, c0_ref,
                       slab_ref, gx_ref):
    """Shapes (all float32):
      x_ref : (S*B, I)     time-major, flattened (row t*B + b = x[b, t, :])
      w1    : (I, 128)     layer-1 input->gates, packed gate axis (i,f,o,g)
      u1    : (H, 128)     layer-1 hidden->gates
      b1    : (1, 128)     layer-1 combined bias (b_ih + b_hh), packed
      w2    : (H, 128)     layer-2 input->gates (input = h1)
      u2    : (H, 128)     layer-2 hidden->gates
      b2    : (1, 128)
      wl    : (H, O)       linear head weight (transposed)
      bl    : (1, O)
      h0,c0 : (L, B, H)    initial states
      slab  : (B, 128)     packed output: out / hn / cn at fixed lane offsets
      gx    : (S*B, 128)   VMEM scratch: hoisted layer-1 gate projections
    Packed gate slots at lane offsets 0/32/64/96 hold (i, f, o, g); each slot
    has H=12 valid lanes followed by zero padding.
    """
    H = HIDDEN_SIZE
    f32 = jnp.float32
    B = h0_ref.shape[1]
    S = x_ref.shape[0] // B

    def cell(gates, c):
        # One EUP sigmoid pass over the whole packed 128-lane gate vector;
        # padding lanes and the g-gate lanes it produces are discarded.
        sig = jax.nn.sigmoid(gates)
        i = sig[:, 0 * GP:0 * GP + H]
        f = sig[:, 1 * GP:1 * GP + H]
        o = sig[:, 2 * GP:2 * GP + H]
        g = jnp.tanh(gates[:, 3 * GP:3 * GP + H])
        c_new = f * c + i * g
        h_new = o * jnp.tanh(c_new)
        return h_new, c_new

    # One-time zero fill of the packed output slab (off the critical path).
    slab_ref[...] = jnp.zeros_like(slab_ref)

    # Layer-1 input projection hoisted out of the recurrence: a single
    # batched (S*B, I) @ (I, 128) matmul with the bias folded in.
    gx_ref[...] = (jnp.dot(x_ref[...], w1_ref[...], preferred_element_type=f32)
                   + b1_ref[...])

    u1 = u1_ref[...]
    w2 = w2_ref[...]
    u2 = u2_ref[...]
    b2 = b2_ref[...]

    h1 = h0_ref[0]
    c1 = c0_ref[0]
    h2 = h0_ref[1]
    c2 = c0_ref[1]

    # Wavefront over both layers (fully unrolled, S=8): layer-2 step t uses
    # the just-produced h1_t, while layer-1 step t+1 is independent of
    # layer-2 step t, so the scheduler overlaps the two chains.
    for t in range(S):
        gates1 = gx_ref[t * B:(t + 1) * B, :] + jnp.dot(
            h1, u1, preferred_element_type=f32)
        h1, c1 = cell(gates1, c1)
        # NOTE: two dots on purpose — h2 @ u2 does not depend on h1_t, so it
        # stays off the serial chain (a fused concat([h1,h2]) @ [W2;U2] would
        # put the whole K=24 matmul behind h1_t).
        gates2 = (jnp.dot(h1, w2, preferred_element_type=f32)
                  + jnp.dot(h2, u2, preferred_element_type=f32) + b2)
        h2, c2 = cell(gates2, c2)

    # Linear head on the last hidden state of the top layer.
    y = jnp.dot(h2, wl_ref[...], preferred_element_type=f32) + bl_ref[...]

    # Pack out / hn / cn into the lane-dense slab (single HBM writeback).
    slab_ref[:, OFF_OUT:OFF_OUT + OUTPUT_SIZE] = y
    slab_ref[:, OFF_HN0:OFF_HN0 + H] = h1
    slab_ref[:, OFF_HN1:OFF_HN1 + H] = h2
    slab_ref[:, OFF_CN0:OFF_CN0 + H] = c1
    slab_ref[:, OFF_CN1:OFF_CN1 + H] = c2


# --------------------------------------------------------------------------
# Wrapper
# --------------------------------------------------------------------------
_VMEM = pl.BlockSpec(memory_space=pltpu.MemorySpace.VMEM)


def lstm_model_forward(kparams, x, h0, c0):
    """x: (B, S, I) batch_first; h0/c0: (num_layers, B, H).

    Returns (out, hn, cn) matching the PyTorch module:
      out: (B, output_size)  -- linear applied to last time step of top layer
      hn, cn: (num_layers, B, H)
    """
    B, S, _ = x.shape
    # Time-major, flattened so the layer-1 projection is one batched dot.
    x_flat = jnp.transpose(x, (1, 0, 2)).reshape(S * B, INPUT_SIZE)

    slab = pl.pallas_call(
        _fused_lstm_kernel,
        out_shape=jax.ShapeDtypeStruct((B, SLAB_LANES), jnp.float32),
        in_specs=[_VMEM] * 11,
        out_specs=_VMEM,
        scratch_shapes=[
            pltpu.VMEM((S * B, GATE_TILE), jnp.float32),  # hoisted projections
        ],
        # Grid-less / single-TC on purpose: the recurrence is serial and the
        # working set is a few KiB.  Only if B grows to hundreds should a
        # leading batch grid axis with dimension_semantics=("parallel",) be
        # added for v7x megacore.
    )(x_flat,
      kparams["w1"], kparams["u1"], kparams["b1"],
      kparams["w2"], kparams["u2"], kparams["b2"],
      kparams["wl"], kparams["bl"], h0, c0)

    H = HIDDEN_SIZE
    out = slab[:, OFF_OUT:OFF_OUT + OUTPUT_SIZE]
    hn = jnp.stack([slab[:, OFF_HN0:OFF_HN0 + H],
                    slab[:, OFF_HN1:OFF_HN1 + H]], axis=0)
    cn = jnp.stack([slab[:, OFF_CN0:OFF_CN0 + H],
                    slab[:, OFF_CN1:OFF_CN1 + H]], axis=0)
    return out, hn, cn


# --------------------------------------------------------------------------
# Parameter init (PyTorch layout) + kernel-layout preparation (gate packing)
# --------------------------------------------------------------------------
def init_params(key):
    """Raw PyTorch-style parameters: uniform(-1/sqrt(H), 1/sqrt(H))."""
    k = 1.0 / math.sqrt(HIDDEN_SIZE)
    layers = []
    for l in range(NUM_LAYERS):
        in_dim = INPUT_SIZE if l == 0 else HIDDEN_SIZE
        key, k1, k2, k3, k4 = jax.random.split(key, 5)
        w_ih = jax.random.uniform(k1, (4 * HIDDEN_SIZE, in_dim), jnp.float32, -k, k)
        w_hh = jax.random.uniform(k2, (4 * HIDDEN_SIZE, HIDDEN_SIZE), jnp.float32, -k, k)
        b_ih = jax.random.uniform(k3, (4 * HIDDEN_SIZE,), jnp.float32, -k, k)
        b_hh = jax.random.uniform(k4, (4 * HIDDEN_SIZE,), jnp.float32, -k, k)
        layers.append((w_ih, w_hh, b_ih, b_hh))
    key, k5, k6 = jax.random.split(key, 3)
    w_lin = jax.random.uniform(k5, (OUTPUT_SIZE, HIDDEN_SIZE), jnp.float32, -k, k)
    b_lin = jax.random.uniform(k6, (OUTPUT_SIZE,), jnp.float32, -k, k)
    return {"lstm": layers, "linear": (w_lin, b_lin)}


# Packed slot order (i, f, o, g) <- PyTorch block order (i, f, g, o).
_PT_BLOCK_FOR_SLOT = (0, 1, 3, 2)


def _pack_gate_weight_t(w):
    """(4H, K) PyTorch layout -> (K, 128); slot s lives at lanes [s*GP, s*GP+H)."""
    K = w.shape[1]
    out = jnp.zeros((K, GATE_TILE), jnp.float32)
    for slot, blk in enumerate(_PT_BLOCK_FOR_SLOT):
        out = out.at[:, slot * GP:slot * GP + HIDDEN_SIZE].set(
            w[blk * HIDDEN_SIZE:(blk + 1) * HIDDEN_SIZE, :].T)
    return out


def _pack_gate_bias(b):
    """(4H,) -> (1, 128) with the same (i, f, o, g) packed slots."""
    out = jnp.zeros((1, GATE_TILE), jnp.float32)
    for slot, blk in enumerate(_PT_BLOCK_FOR_SLOT):
        out = out.at[0, slot * GP:slot * GP + HIDDEN_SIZE].set(
            b[blk * HIDDEN_SIZE:(blk + 1) * HIDDEN_SIZE])
    return out


def prepare_params(raw):
    """Convert raw PyTorch-layout params into the kernel's packed layout."""
    (w_ih1, w_hh1, b_ih1, b_hh1), (w_ih2, w_hh2, b_ih2, b_hh2) = raw["lstm"]
    w_lin, b_lin = raw["linear"]
    return {
        "w1": _pack_gate_weight_t(w_ih1),
        "u1": _pack_gate_weight_t(w_hh1),
        "b1": _pack_gate_bias(b_ih1 + b_hh1),
        "w2": _pack_gate_weight_t(w_ih2),
        "u2": _pack_gate_weight_t(w_hh2),
        "b2": _pack_gate_bias(b_ih2 + b_hh2),
        "wl": w_lin.T.astype(jnp.float32),
        "bl": b_lin.reshape(1, OUTPUT_SIZE).astype(jnp.float32),
    }


# --------------------------------------------------------------------------
# Pure-JAX reference (uses the raw, unpadded parameters)
# --------------------------------------------------------------------------
def reference_forward(raw, x, h0, c0):
    H = HIDDEN_SIZE
    layer_in = jnp.transpose(x, (1, 0, 2))
    hs, cs = [], []
    for l in range(NUM_LAYERS):
        w_ih, w_hh, b_ih, b_hh = raw["lstm"][l]
        wi, wh, b = w_ih.T, w_hh.T, (b_ih + b_hh)[None, :]

        def step(carry, x_t, wi=wi, wh=wh, b=b):
            h, c = carry
            gates = x_t @ wi + h @ wh + b
            i = jax.nn.sigmoid(gates[:, 0:H])
            f = jax.nn.sigmoid(gates[:, H:2 * H])
            g = jnp.tanh(gates[:, 2 * H:3 * H])
            o = jax.nn.sigmoid(gates[:, 3 * H:4 * H])
            c_new = f * c + i * g
            h_new = o * jnp.tanh(c_new)
            return (h_new, c_new), h_new

        (hn_l, cn_l), y = lax.scan(step, (h0[l], c0[l]), layer_in)
        hs.append(hn_l)
        cs.append(cn_l)
        layer_in = y
    w_lin, b_lin = raw["linear"]
    out = layer_in[-1] @ w_lin.T + b_lin[None, :]
    return out, jnp.stack(hs, 0), jnp.stack(cs, 0)


# --------------------------------------------------------------------------
if __name__ == "__main__":
    B, S = 4, 8
    key = jax.random.PRNGKey(0)
    key, kp, kx, kh, kc = jax.random.split(key, 5)

    raw_params = init_params(kp)
    kparams = prepare_params(raw_params)

    x = jax.random.normal(kx, (B, S, INPUT_SIZE), jnp.float32)
    # The PyTorch forward draws randn h0/c0 when not given; here we pass
    # deterministic random states explicitly.
    h0 = jax.random.normal(kh, (NUM_LAYERS, B, HIDDEN_SIZE), jnp.float32)
    c0 = jax.random.normal(kc, (NUM_LAYERS, B, HIDDEN_SIZE), jnp.float32)

    out, hn, cn = jax.block_until_ready(lstm_model_forward(kparams, x, h0, c0))

    out_r, hn_r, cn_r = reference_forward(raw_params, x, h0, c0)
    assert out.shape == (B, OUTPUT_SIZE)
    assert hn.shape == (NUM_LAYERS, B, HIDDEN_SIZE)
    assert cn.shape == (NUM_LAYERS, B, HIDDEN_SIZE)
    assert jnp.allclose(out, out_r, atol=1e-4, rtol=1e-4)
    assert jnp.allclose(hn, hn_r, atol=1e-4, rtol=1e-4)
    assert jnp.allclose(cn, cn_r, atol=1e-4, rtol=1e-4)

    print("KERNEL_OK")
</pallas_src>

<mosaic_0001>
module attributes {stable_mosaic.version = 11 : i64} {
  func.func @_fused_lstm_kernel(%arg0: memref<32x10xf32, #tpu.memory_space<vmem>>, %arg1: memref<10x128xf32, #tpu.memory_space<vmem>>, %arg2: memref<12x128xf32, #tpu.memory_space<vmem>>, %arg3: memref<1x128xf32, #tpu.memory_space<vmem>>, %arg4: memref<12x128xf32, #tpu.memory_space<vmem>>, %arg5: memref<12x128xf32, #tpu.memory_space<vmem>>, %arg6: memref<1x128xf32, #tpu.memory_space<vmem>>, %arg7: memref<12x1xf32, #tpu.memory_space<vmem>>, %arg8: memref<1x1xf32, #tpu.memory_space<vmem>>, %arg9: memref<2x4x12xf32, #tpu.memory_space<vmem>>, %arg10: memref<2x4x12xf32, #tpu.memory_space<vmem>>, %arg11: memref<4x128xf32, #tpu.memory_space<vmem>>, %arg12: memref<32x128xf32, #tpu.memory_space<vmem>>) attributes {dimension_semantics = [], scalar_prefetch = 0 : i64, scratch_operands = 1 : i64, tpu.core_type = #tpu.core_type<tc>} {
    %cst = arith.constant 0.000000e+00 : f32
    %0 = vector.broadcast %cst : f32 to vector<4x128xf32>
    %c0 = arith.constant 0 : index
    %c0_0 = arith.constant 0 : index
    %1 = vector.load %arg11[%c0, %c0_0] : memref<4x128xf32, #tpu.memory_space<vmem>>, vector<4x128xf32>
    tpu.vector_store %arg11[%c0, %c0_0], %0 {strides = array<i32>} : memref<4x128xf32, #tpu.memory_space<vmem>>, vector<4x128xf32>,
    %c0_1 = arith.constant 0 : index
    %c0_2 = arith.constant 0 : index
    %2 = vector.load %arg0[%c0_1, %c0_2] : memref<32x10xf32, #tpu.memory_space<vmem>>, vector<32x10xf32>
    %c0_3 = arith.constant 0 : index
    %c0_4 = arith.constant 0 : index
    %3 = vector.load %arg1[%c0_3, %c0_4] : memref<10x128xf32, #tpu.memory_space<vmem>>, vector<10x128xf32>
    %cst_5 = arith.constant dense<0.000000e+00> : vector<32x128xf32>
    %4 = tpu.matmul %2, %3, %cst_5 {dimension_numbers = #tpu.dot_dimension_numbers<[1], [0], [0], [1], [0, 0, 1, 1], [], []>} : vector<32x10xf32>, vector<10x128xf32>, vector<32x128xf32> -> vector<32x128xf32>
    %c0_6 = arith.constant 0 : index
    %c0_7 = arith.constant 0 : index
    %5 = vector.load %arg3[%c0_6, %c0_7] : memref<1x128xf32, #tpu.memory_space<vmem>>, vector<1x128xf32>
    %6 = vector.broadcast %5 : vector<1x128xf32> to vector<32x128xf32>
    %7 = arith.addf %4, %6 : vector<32x128xf32>
    %c0_8 = arith.constant 0 : index
    %c0_9 = arith.constant 0 : index
    %8 = vector.load %arg12[%c0_8, %c0_9] : memref<32x128xf32, #tpu.memory_space<vmem>>, vector<32x128xf32>
    tpu.vector_store %arg12[%c0_8, %c0_9], %7 {strides = array<i32>} : memref<32x128xf32, #tpu.memory_space<vmem>>, vector<32x128xf32>,
    %c0_10 = arith.constant 0 : index
    %c0_11 = arith.constant 0 : index
    %9 = vector.load %arg2[%c0_10, %c0_11] : memref<12x128xf32, #tpu.memory_space<vmem>>, vector<12x128xf32>
    %c0_12 = arith.constant 0 : index
    %c0_13 = arith.constant 0 : index
    %10 = vector.load %arg4[%c0_12, %c0_13] : memref<12x128xf32, #tpu.memory_space<vmem>>, vector<12x128xf32>
    %c0_14 = arith.constant 0 : index
    %c0_15 = arith.constant 0 : index
    %11 = vector.load %arg5[%c0_14, %c0_15] : memref<12x128xf32, #tpu.memory_space<vmem>>, vector<12x128xf32>
    %c0_16 = arith.constant 0 : index
    %c0_17 = arith.constant 0 : index
    %12 = vector.load %arg6[%c0_16, %c0_17] : memref<1x128xf32, #tpu.memory_space<vmem>>, vector<1x128xf32>
    %c0_18 = arith.constant 0 : index
    %c0_19 = arith.constant 0 : index
    %c0_20 = arith.constant 0 : index
    %13 = vector.load %arg9[%c0_18, %c0_19, %c0_20] : memref<2x4x12xf32, #tpu.memory_space<vmem>>, vector<1x4x12xf32>
    %14 = vector.shape_cast %13 : vector<1x4x12xf32> to vector<4x12xf32>
    %c0_21 = arith.constant 0 : index
    %c0_22 = arith.constant 0 : index
    %c0_23 = arith.constant 0 : index
    %15 = vector.load %arg10[%c0_21, %c0_22, %c0_23] : memref<2x4x12xf32, #tpu.memory_space<vmem>>, vector<1x4x12xf32>
    %16 = vector.shape_cast %15 : vector<1x4x12xf32> to vector<4x12xf32>
    %c1 = arith.constant 1 : index
    %c0_24 = arith.constant 0 : index
    %c0_25 = arith.constant 0 : index
    %17 = vector.load %arg9[%c1, %c0_24, %c0_25] : memref<2x4x12xf32, #tpu.memory_space<vmem>>, vector<1x4x12xf32>
    %18 = vector.shape_cast %17 : vector<1x4x12xf32> to vector<4x12xf32>
    %c1_26 = arith.constant 1 : index
    %c0_27 = arith.constant 0 : index
    %c0_28 = arith.constant 0 : index
    %19 = vector.load %arg10[%c1_26, %c0_27, %c0_28] : memref<2x4x12xf32, #tpu.memory_space<vmem>>, vector<1x4x12xf32>
    %20 = vector.shape_cast %19 : vector<1x4x12xf32> to vector<4x12xf32>
    %c0_29 = arith.constant 0 : index
    %c0_30 = arith.constant 0 : index
    %21 = vector.load %arg12[%c0_29, %c0_30] : memref<32x128xf32, #tpu.memory_space<vmem>>, vector<4x128xf32>
    %cst_31 = arith.constant dense<0.000000e+00> : vector<4x128xf32>
    %22 = tpu.matmul %14, %9, %cst_31 {dimension_numbers = #tpu.dot_dimension_numbers<[1], [0], [0], [1], [0, 0, 1, 1], [], []>} : vector<4x12xf32>, vector<12x128xf32>, vector<4x128xf32> -> vector<4x128xf32>
    %23 = arith.addf %21, %22 : vector<4x128xf32>
    %24 = arith.negf %23 : vector<4x128xf32>
    %25 = math.exp %24 : vector<4x128xf32>
    %cst_32 = arith.constant 1.000000e+00 : f32
    %26 = vector.broadcast %cst_32 : f32 to vector<4x128xf32>
    %27 = arith.addf %26, %25 : vector<4x128xf32>
    %28 = arith.divf %26, %27 : vector<4x128xf32>
    %29 = vector.extract_strided_slice %28 {offsets = [0, 0], sizes = [4, 12], strides = [1, 1]} : vector<4x128xf32> to vector<4x12xf32>
    %30 = vector.extract_strided_slice %28 {offsets = [0, 32], sizes = [4, 12], strides = [1, 1]} : vector<4x128xf32> to vector<4x12xf32>
    %31 = vector.extract_strided_slice %28 {offsets = [0, 64], sizes = [4, 12], strides = [1, 1]} : vector<4x128xf32> to vector<4x12xf32>
    %32 = vector.extract_strided_slice %23 {offsets = [0, 96], sizes = [4, 12], strides = [1, 1]} : vector<4x128xf32> to vector<4x12xf32>
    %33 = math.tanh %32 : vector<4x12xf32>
    %34 = arith.mulf %30, %16 : vector<4x12xf32>
    %35 = arith.mulf %29, %33 : vector<4x12xf32>
    %36 = arith.addf %34, %35 : vector<4x12xf32>
    %37 = math.tanh %36 : vector<4x12xf32>
    %38 = arith.mulf %31, %37 : vector<4x12xf32>
    %cst_33 = arith.constant dense<0.000000e+00> : vector<4x128xf32>
    %39 = tpu.matmul %38, %10, %cst_33 {dimension_numbers = #tpu.dot_dimension_numbers<[1], [0], [0], [1], [0, 0, 1, 1], [], []>} : vector<4x12xf32>, vector<12x128xf32>, vector<4x128xf32> -> vector<4x128xf32>
    %cst_34 = arith.constant dense<0.000000e+00> : vector<4x128xf32>
    %40 = tpu.matmul %18, %11, %cst_34 {dimension_numbers = #tpu.dot_dimension_numbers<[1], [0], [0], [1], [0, 0, 1, 1], [], []>} : vector<4x12xf32>, vector<12x128xf32>, vector<4x128xf32> -> vector<4x128xf32>
    %41 = arith.addf %39, %40 : vector<4x128xf32>
    %42 = vector.broadcast %12 : vector<1x128xf32> to vector<4x128xf32>
    %43 = arith.addf %41, %42 : vector<4x128xf32>
    %44 = arith.negf %43 : vector<4x128xf32>
    %45 = math.exp %44 : vector<4x128xf32>
    %cst_35 = arith.constant 1.000000e+00 : f32
    %46 = vector.broadcast %cst_35 : f32 to vector<4x128xf32>
    %47 = arith.addf %46, %45 : vector<4x128xf32>
    %48 = arith.divf %46, %47 : vector<4x128xf32>
    %49 = vector.extract_strided_slice %48 {offsets = [0, 0], sizes = [4, 12], strides = [1, 1]} : vector<4x128xf32> to vector<4x12xf32>
    %50 = vector.extract_strided_slice %48 {offsets = [0, 32], sizes = [4, 12], strides = [1, 1]} : vector<4x128xf32> to vector<4x12xf32>
    %51 = vector.extract_strided_slice %48 {offsets = [0, 64], sizes = [4, 12], strides = [1, 1]} : vector<4x128xf32> to vector<4x12xf32>
    %52 = vector.extract_strided_slice %43 {offsets = [0, 96], sizes = [4, 12], strides = [1, 1]} : vector<4x128xf32> to vector<4x12xf32>
    %53 = math.tanh %52 : vector<4x12xf32>
    %54 = arith.mulf %50, %20 : vector<4x12xf32>
    %55 = arith.mulf %49, %53 : vector<4x12xf32>
    %56 = arith.addf %54, %55 : vector<4x12xf32>
    %57 = math.tanh %56 : vector<4x12xf32>
    %58 = arith.mulf %51, %57 : vector<4x12xf32>
    %c4 = arith.constant 4 : index
    %c0_36 = arith.constant 0 : index
    %59 = vector.load %arg12[%c4, %c0_36] : memref<32x128xf32, #tpu.memory_space<vmem>>, vector<4x128xf32>
    %cst_37 = arith.constant dense<0.000000e+00> : vector<4x128xf32>
    %60 = tpu.matmul %38, %9, %cst_37 {dimension_numbers = #tpu.dot_dimension_numbers<[1], [0], [0], [1], [0, 0, 1, 1], [], []>} : vector<4x12xf32>, vector<12x128xf32>, vector<4x128xf32> -> vector<4x128xf32>
    %61 = arith.addf %59, %60 : vector<4x128xf32>
    %62 = arith.negf %61 : vector<4x128xf32>
    %63 = math.exp %62 : vector<4x128xf32>
    %cst_38 = arith.constant 1.000000e+00 : f32
    %64 = vector.broadcast %cst_38 : f32 to vector<4x128xf32>
    %65 = arith.addf %64, %63 : vector<4x128xf32>
    %66 = arith.divf %64, %65 : vector<4x128xf32>
    %67 = vector.extract_strided_slice %66 {offsets = [0, 0], sizes = [4, 12], strides = [1, 1]} : vector<4x128xf32> to vector<4x12xf32>
    %68 = vector.extract_strided_slice %66 {offsets = [0, 32], sizes = [4, 12], strides = [1, 1]} : vector<4x128xf32> to vector<4x12xf32>
    %69 = vector.extract_strided_slice %66 {offsets = [0, 64], sizes = [4, 12], strides = [1, 1]} : vector<4x128xf32> to vector<4x12xf32>
    %70 = vector.extract_strided_slice %61 {offsets = [0, 96], sizes = [4, 12], strides = [1, 1]} : vector<4x128xf32> to vector<4x12xf32>
    %71 = math.tanh %70 : vector<4x12xf32>
    %72 = arith.mulf %68, %36 : vector<4x12xf32>
    %73 = arith.mulf %67, %71 : vector<4x12xf32>
    %74 = arith.addf %72, %73 : vector<4x12xf32>
    %75 = math.tanh %74 : vector<4x12xf32>
    %76 = arith.mulf %69, %75 : vector<4x12xf32>
    %cst_39 = arith.constant dense<0.000000e+00> : vector<4x128xf32>
    %77 = tpu.matmul %76, %10, %cst_39 {dimension_numbers = #tpu.dot_dimension_numbers<[1], [0], [0], [1], [0, 0, 1, 1], [], []>} : vector<4x12xf32>, vector<12x128xf32>, vector<4x128xf32> -> vector<4x128xf32>
    %cst_40 = arith.constant dense<0.000000e+00> : vector<4x128xf32>
    %78 = tpu.matmul %58, %11, %cst_40 {dimension_numbers = #tpu.dot_dimension_numbers<[1], [0], [0], [1], [0, 0, 1, 1], [], []>} : vector<4x12xf32>, vector<12x128xf32>, vector<4x128xf32> -> vector<4x128xf32>
    %79 = arith.addf %77, %78 : vector<4x128xf32>
    %80 = vector.broadcast %12 : vector<1x128xf32> to vector<4x128xf32>
    %81 = arith.addf %79, %80 : vector<4x128xf32>
    %82 = arith.negf %81 : vector<4x128xf32>
    %83 = math.exp %82 : vector<4x128xf32>
    %cst_41 = arith.constant 1.000000e+00 : f32
    %84 = vector.broadcast %cst_41 : f32 to vector<4x128xf32>
    %85 = arith.addf %84, %83 : vector<4x128xf32>
    %86 = arith.divf %84, %85 : vector<4x128xf32>
    %87 = vector.extract_strided_slice %86 {offsets = [0, 0], sizes = [4, 12], strides = [1, 1]} : vector<4x128xf32> to vector<4x12xf32>
    %88 = vector.extract_strided_slice %86 {offsets = [0, 32], sizes = [4, 12], strides = [1, 1]} : vector<4x128xf32> to vector<4x12xf32>
    %89 = vector.extract_strided_slice %86 {offsets = [0, 64], sizes = [4, 12], strides = [1, 1]} : vector<4x128xf32> to vector<4x12xf32>
    %90 = vector.extract_strided_slice %81 {offsets = [0, 96], sizes = [4, 12], strides = [1, 1]} : vector<4x128xf32> to vector<4x12xf32>
    %91 = math.tanh %90 : vector<4x12xf32>
    %92 = arith.mulf %88, %56 : vector<4x12xf32>
    %93 = arith.mulf %87, %91 : vector<4x12xf32>
    %94 = arith.addf %92, %93 : vector<4x12xf32>
    %95 = math.tanh %94 : vector<4x12xf32>
    %96 = arith.mulf %89, %95 : vector<4x12xf32>
    %c8 = arith.constant 8 : index
    %c0_42 = arith.constant 0 : index
    %97 = vector.load %arg12[%c8, %c0_42] : memref<32x128xf32, #tpu.memory_space<vmem>>, vector<4x128xf32>
    %cst_43 = arith.constant dense<0.000000e+00> : vector<4x128xf32>
    %98 = tpu.matmul %76, %9, %cst_43 {dimension_numbers = #tpu.dot_dimension_numbers<[1], [0], [0], [1], [0, 0, 1, 1], [], []>} : vector<4x12xf32>, vector<12x128xf32>, vector<4x128xf32> -> vector<4x128xf32>
    %99 = arith.addf %97, %98 : vector<4x128xf32>
    %100 = arith.negf %99 : vector<4x128xf32>
    %101 = math.exp %100 : vector<4x128xf32>
    %cst_44 = arith.constant 1.000000e+00 : f32
    %102 = vector.broadcast %cst_44 : f32 to vector<4x128xf32>
    %103 = arith.addf %102, %101 : vector<4x128xf32>
    %104 = arith.divf %102, %103 : vector<4x128xf32>
    %105 = vector.extract_strided_slice %104 {offsets = [0, 0], sizes = [4, 12], strides = [1, 1]} : vector<4x128xf32> to vector<4x12xf32>
    %106 = vector.extract_strided_slice %104 {offsets = [0, 32], sizes = [4, 12], strides = [1, 1]} : vector<4x128xf32> to vector<4x12xf32>
    %107 = vector.extract_strided_slice %104 {offsets = [0, 64], sizes = [4, 12], strides = [1, 1]} : vector<4x128xf32> to vector<4x12xf32>
    %108 = vector.extract_strided_slice %99 {offsets = [0, 96], sizes = [4, 12], strides = [1, 1]} : vector<4x128xf32> to vector<4x12xf32>
    %109 = math.tanh %108 : vector<4x12xf32>
    %110 = arith.mulf %106, %74 : vector<4x12xf32>
    %111 = arith.mulf %105, %109 : vector<4x12xf32>
    %112 = arith.addf %110, %111 : vector<4x12xf32>
    %113 = math.tanh %112 : vector<4x12xf32>
    %114 = arith.mulf %107, %113 : vector<4x12xf32>
    %cst_45 = arith.constant dense<0.000000e+00> : vector<4x128xf32>
    %115 = tpu.matmul %114, %10, %cst_45 {dimension_numbers = #tpu.dot_dimension_numbers<[1], [0], [0], [1], [0, 0, 1, 1], [], []>} : vector<4x12xf32>, vector<12x128xf32>, vector<4x128xf32> -> vector<4x128xf32>
    %cst_46 = arith.constant dense<0.000000e+00> : vector<4x128xf32>
    %116 = tpu.matmul %96, %11, %cst_46 {dimension_numbers = #tpu.dot_dimension_numbers<[1], [0], [0], [1], [0, 0, 1, 1], [], []>} : vector<4x12xf32>, vector<12x128xf32>, vector<4x128xf32> -> vector<4x128xf32>
    %117 = arith.addf %115, %116 : vector<4x128xf32>
    %118 = vector.broadcast %12 : vector<1x128xf32> to vector<4x128xf32>
    %119 = arith.addf %117, %118 : vector<4x128xf32>
    %120 = arith.negf %119 : vector<4x128xf32>
    %121 = math.exp %120 : vector<4x128xf32>
    %cst_47 = arith.constant 1.000000e+00 : f32
    %122 = vector.broadcast %cst_47 : f32 to vector<4x128xf32>
    %123 = arith.addf %122, %121 : vector<4x128xf32>
    %124 = arith.divf %122, %123 : vector<4x128xf32>
    %125 = vector.extract_strided_slice %124 {offsets = [0, 0], sizes = [4, 12], strides = [1, 1]} : vector<4x128xf32> to vector<4x12xf32>
    %126 = vector.extract_strided_slice %124 {offsets = [0, 32], sizes = [4, 12], strides = [1, 1]} : vector<4x128xf32> to vector<4x12xf32>
    %127 = vector.extract_strided_slice %124 {offsets = [0, 64], sizes = [4, 12], strides = [1, 1]} : vector<4x128xf32> to vector<4x12xf32>
    %128 = vector.extract_strided_slice %119 {offsets = [0, 96], sizes = [4, 12], strides = [1, 1]} : vector<4x128xf32> to vector<4x12xf32>
    %129 = math.tanh %128 : vector<4x12xf32>
    %130 = arith.mulf %126, %94 : vector<4x12xf32>
    %131 = arith.mulf %125, %129 : vector<4x12xf32>
    %132 = arith.addf %130, %131 : vector<4x12xf32>
    %133 = math.tanh %132 : vector<4x12xf32>
    %134 = arith.mulf %127, %133 : vector<4x12xf32>
    %c12 = arith.constant 12 : index
    %c0_48 = arith.constant 0 : index
    %135 = vector.load %arg12[%c12, %c0_48] : memref<32x128xf32, #tpu.memory_space<vmem>>, vector<4x128xf32>
    %cst_49 = arith.constant dense<0.000000e+00> : vector<4x128xf32>
    %136 = tpu.matmul %114, %9, %cst_49 {dimension_numbers = #tpu.dot_dimension_numbers<[1], [0], [0], [1], [0, 0, 1, 1], [], []>} : vector<4x12xf32>, vector<12x128xf32>, vector<4x128xf32> -> vector<4x128xf32>
    %137 = arith.addf %135, %136 : vector<4x128xf32>
    %138 = arith.negf %137 : vector<4x128xf32>
    %139 = math.exp %138 : vector<4x128xf32>
    %cst_50 = arith.constant 1.000000e+00 : f32
    %140 = vector.broadcast %cst_50 : f32 to vector<4x128xf32>
    %141 = arith.addf %140, %139 : vector<4x128xf32>
    %142 = arith.divf %140, %141 : vector<4x128xf32>
    %143 = vector.extract_strided_slice %142 {offsets = [0, 0], sizes = [4, 12], strides = [1, 1]} : vector<4x128xf32> to vector<4x12xf32>
    %144 = vector.extract_strided_slice %142 {offsets = [0, 32], sizes = [4, 12], strides = [1, 1]} : vector<4x128xf32> to vector<4x12xf32>
    %145 = vector.extract_strided_slice %142 {offsets = [0, 64], sizes = [4, 12], strides = [1, 1]} : vector<4x128xf32> to vector<4x12xf32>
    %146 = vector.extract_strided_slice %137 {offsets = [0, 96], sizes = [4, 12], strides = [1, 1]} : vector<4x128xf32> to vector<4x12xf32>
    %147 = math.tanh %146 : vector<4x12xf32>
    %148 = arith.mulf %144, %112 : vector<4x12xf32>
    %149 = arith.mulf %143, %147 : vector<4x12xf32>
    %150 = arith.addf %148, %149 : vector<4x12xf32>
    %151 = math.tanh %150 : vector<4x12xf32>
    %152 = arith.mulf %145, %151 : vector<4x12xf32>
    %cst_51 = arith.constant dense<0.000000e+00> : vector<4x128xf32>
    %153 = tpu.matmul %152, %10, %cst_51 {dimension_numbers = #tpu.dot_dimension_numbers<[1], [0], [0], [1], [0, 0, 1, 1], [], []>} : vector<4x12xf32>, vector<12x128xf32>, vector<4x128xf32> -> vector<4x128xf32>
    %cst_52 = arith.constant dense<0.000000e+00> : vector<4x128xf32>
    %154 = tpu.matmul %134, %11, %cst_52 {dimension_numbers = #tpu.dot_dimension_numbers<[1], [0], [0], [1], [0, 0, 1, 1], [], []>} : vector<4x12xf32>, vector<12x128xf32>, vector<4x128xf32> -> vector<4x128xf32>
    %155 = arith.addf %153, %154 : vector<4x128xf32>
    %156 = vector.broadcast %12 : vector<1x128xf32> to vector<4x128xf32>
    %157 = arith.addf %155, %156 : vector<4x128xf32>
    %158 = arith.negf %157 : vector<4x128xf32>
    %159 = math.exp %158 : vector<4x128xf32>
    %cst_53 = arith.constant 1.000000e+00 : f32
    %160 = vector.broadcast %cst_53 : f32 to vector<4x128xf32>
    %161 = arith.addf %160, %159 : vector<4x128xf32>
    %162 = arith.divf %160, %161 : vector<4x128xf32>
    %163 = vector.extract_strided_slice %162 {offsets = [0, 0], sizes = [4, 12], strides = [1, 1]} : vector<4x128xf32> to vector<4x12xf32>
    %164 = vector.extract_strided_slice %162 {offsets = [0, 32], sizes = [4, 12], strides = [1, 1]} : vector<4x128xf32> to vector<4x12xf32>
    %165 = vector.extract_strided_slice %162 {offsets = [0, 64], sizes = [4, 12], strides = [1, 1]} : vector<4x128xf32> to vector<4x12xf32>
    %166 = vector.extract_strided_slice %157 {offsets = [0, 96], sizes = [4, 12], strides = [1, 1]} : vector<4x128xf32> to vector<4x12xf32>
    %167 = math.tanh %166 : vector<4x12xf32>
    %168 = arith.mulf %164, %132 : vector<4x12xf32>
    %169 = arith.mulf %163, %167 : vector<4x12xf32>
    %170 = arith.addf %168, %169 : vector<4x12xf32>
    %171 = math.tanh %170 : vector<4x12xf32>
    %172 = arith.mulf %165, %171 : vector<4x12xf32>
    %c16 = arith.constant 16 : index
    %c0_54 = arith.constant 0 : index
    %173 = vector.load %arg12[%c16, %c0_54] : memref<32x128xf32, #tpu.memory_space<vmem>>, vector<4x128xf32>
    %cst_55 = arith.constant dense<0.000000e+00> : vector<4x128xf32>
    %174 = tpu.matmul %152, %9, %cst_55 {dimension_numbers = #tpu.dot_dimension_numbers<[1], [0], [0], [1], [0, 0, 1, 1], [], []>} : vector<4x12xf32>, vector<12x128xf32>, vector<4x128xf32> -> vector<4x128xf32>
    %175 = arith.addf %173, %174 : vector<4x128xf32>
    %176 = arith.negf %175 : vector<4x128xf32>
    %177 = math.exp %176 : vector<4x128xf32>
    %cst_56 = arith.constant 1.000000e+00 : f32
    %178 = vector.broadcast %cst_56 : f32 to vector<4x128xf32>
    %179 = arith.addf %178, %177 : vector<4x128xf32>
    %180 = arith.divf %178, %179 : vector<4x128xf32>
    %181 = vector.extract_strided_slice %180 {offsets = [0, 0], sizes = [4, 12], strides = [1, 1]} : vector<4x128xf32> to vector<4x12xf32>
    %182 = vector.extract_strided_slice %180 {offsets = [0, 32], sizes = [4, 12], strides = [1, 1]} : vector<4x128xf32> to vector<4x12xf32>
    %183 = vector.extract_strided_slice %180 {offsets = [0, 64], sizes = [4, 12], strides = [1, 1]} : vector<4x128xf32> to vector<4x12xf32>
    %184 = vector.extract_strided_slice %175 {offsets = [0, 96], sizes = [4, 12], strides = [1, 1]} : vector<4x128xf32> to vector<4x12xf32>
    %185 = math.tanh %184 : vector<4x12xf32>
    %186 = arith.mulf %182, %150 : vector<4x12xf32>
    %187 = arith.mulf %181, %185 : vector<4x12xf32>
    %188 = arith.addf %186, %187 : vector<4x12xf32>
    %189 = math.tanh %188 : vector<4x12xf32>
    %190 = arith.mulf %183, %189 : vector<4x12xf32>
    %cst_57 = arith.constant dense<0.000000e+00> : vector<4x128xf32>
    %191 = tpu.matmul %190, %10, %cst_57 {dimension_numbers = #tpu.dot_dimension_numbers<[1], [0], [0], [1], [0, 0, 1, 1], [], []>} : vector<4x12xf32>, vector<12x128xf32>, vector<4x128xf32> -> vector<4x128xf32>
    %cst_58 = arith.constant dense<0.000000e+00> : vector<4x128xf32>
    %192 = tpu.matmul %172, %11, %cst_58 {dimension_numbers = #tpu.dot_dimension_numbers<[1], [0], [0], [1], [0, 0, 1, 1], [], []>} : vector<4x12xf32>, vector<12x128xf32>, vector<4x128xf32> -> vector<4x128xf32>
    %193 = arith.addf %191, %192 : vector<4x128xf32>
    %194 = vector.broadcast %12 : vector<1x128xf32> to vector<4x128xf32>
    %195 = arith.addf %193, %194 : vector<4x128xf32>
    %196 = arith.negf %195 : vector<4x128xf32>
    %197 = math.exp %196 : vector<4x128xf32>
    %cst_59 = arith.constant 1.000000e+00 : f32
    %198 = vector.broadcast %cst_59 : f32 to vector<4x128xf32>
    %199 = arith.addf %198, %197 : vector<4x128xf32>
    %200 = arith.divf %198, %199 : vector<4x128xf32>
    %201 = vector.extract_strided_slice %200 {offsets = [0, 0], sizes = [4, 12], strides = [1, 1]} : vector<4x128xf32> to vector<4x12xf32>
    %202 = vector.extract_strided_slice %200 {offsets = [0, 32], sizes = [4, 12], strides = [1, 1]} : vector<4x128xf32> to vector<4x12xf32>
    %203 = vector.extract_strided_slice %200 {offsets = [0, 64], sizes = [4, 12], strides = [1, 1]} : vector<4x128xf32> to vector<4x12xf32>
    %204 = vector.extract_strided_slice %195 {offsets = [0, 96], sizes = [4, 12], strides = [1, 1]} : vector<4x128xf32> to vector<4x12xf32>
    %205 = math.tanh %204 : vector<4x12xf32>
    %206 = arith.mulf %202, %170 : vector<4x12xf32>
    %207 = arith.mulf %201, %205 : vector<4x12xf32>
    %208 = arith.addf %206, %207 : vector<4x12xf32>
    %209 = math.tanh %208 : vector<4x12xf32>
    %210 = arith.mulf %203, %209 : vector<4x12xf32>
    %c20 = arith.constant 20 : index
    %c0_60 = arith.constant 0 : index
    %211 = vector.load %arg12[%c20, %c0_60] : memref<32x128xf32, #tpu.memory_space<vmem>>, vector<4x128xf32>
    %cst_61 = arith.constant dense<0.000000e+00> : vector<4x128xf32>
    %212 = tpu.matmul %190, %9, %cst_61 {dimension_numbers = #tpu.dot_dimension_numbers<[1], [0], [0], [1], [0, 0, 1, 1], [], []>} : vector<4x12xf32>, vector<12x128xf32>, vector<4x128xf32> -> vector<4x128xf32>
    %213 = arith.addf %211, %212 : vector<4x128xf32>
    %214 = arith.negf %213 : vector<4x128xf32>
    %215 = math.exp %214 : vector<4x128xf32>
    %cst_62 = arith.constant 1.000000e+00 : f32
    %216 = vector.broadcast %cst_62 : f32 to vector<4x128xf32>
    %217 = arith.addf %216, %215 : vector<4x128xf32>
    %218 = arith.divf %216, %217 : vector<4x128xf32>
    %219 = vector.extract_strided_slice %218 {offsets = [0, 0], sizes = [4, 12], strides = [1, 1]} : vector<4x128xf32> to vector<4x12xf32>
    %220 = vector.extract_strided_slice %218 {offsets = [0, 32], sizes = [4, 12], strides = [1, 1]} : vector<4x128xf32> to vector<4x12xf32>
    %221 = vector.extract_strided_slice %218 {offsets = [0, 64], sizes = [4, 12], strides = [1, 1]} : vector<4x128xf32> to vector<4x12xf32>
    %222 = vector.extract_strided_slice %213 {offsets = [0, 96], sizes = [4, 12], strides = [1, 1]} : vector<4x128xf32> to vector<4x12xf32>
    %223 = math.tanh %222 : vector<4x12xf32>
    %224 = arith.mulf %220, %188 : vector<4x12xf32>
    %225 = arith.mulf %219, %223 : vector<4x12xf32>
    %226 = arith.addf %224, %225 : vector<4x12xf32>
    %227 = math.tanh %226 : vector<4x12xf32>
    %228 = arith.mulf %221, %227 : vector<4x12xf32>
    %cst_63 = arith.constant dense<0.000000e+00> : vector<4x128xf32>
    %229 = tpu.matmul %228, %10, %cst_63 {dimension_numbers = #tpu.dot_dimension_numbers<[1], [0], [0], [1], [0, 0, 1, 1], [], []>} : vector<4x12xf32>, vector<12x128xf32>, vector<4x128xf32> -> vector<4x128xf32>
    %cst_64 = arith.constant dense<0.000000e+00> : vector<4x128xf32>
    %230 = tpu.matmul %210, %11, %cst_64 {dimension_numbers = #tpu.dot_dimension_numbers<[1], [0], [0], [1], [0, 0, 1, 1], [], []>} : vector<4x12xf32>, vector<12x128xf32>, vector<4x128xf32> -> vector<4x128xf32>
    %231 = arith.addf %229, %230 : vector<4x128xf32>
    %232 = vector.broadcast %12 : vector<1x128xf32> to vector<4x128xf32>
    %233 = arith.addf %231, %232 : vector<4x128xf32>
    %234 = arith.negf %233 : vector<4x128xf32>
    %235 = math.exp %234 : vector<4x128xf32>
    %cst_65 = arith.constant 1.000000e+00 : f32
    %236 = vector.broadcast %cst_65 : f32 to vector<4x128xf32>
    %237 = arith.addf %236, %235 : vector<4x128xf32>
    %238 = arith.divf %236, %237 : vector<4x128xf32>
    %239 = vector.extract_strided_slice %238 {offsets = [0, 0], sizes = [4, 12], strides = [1, 1]} : vector<4x128xf32> to vector<4x12xf32>
    %240 = vector.extract_strided_slice %238 {offsets = [0, 32], sizes = [4, 12], strides = [1, 1]} : vector<4x128xf32> to vector<4x12xf32>
    %241 = vector.extract_strided_slice %238 {offsets = [0, 64], sizes = [4, 12], strides = [1, 1]} : vector<4x128xf32> to vector<4x12xf32>
    %242 = vector.extract_strided_slice %233 {offsets = [0, 96], sizes = [4, 12], strides = [1, 1]} : vector<4x128xf32> to vector<4x12xf32>
    %243 = math.tanh %242 : vector<4x12xf32>
    %244 = arith.mulf %240, %208 : vector<4x12xf32>
    %245 = arith.mulf %239, %243 : vector<4x12xf32>
    %246 = arith.addf %244, %245 : vector<4x12xf32>
    %247 = math.tanh %246 : vector<4x12xf32>
    %248 = arith.mulf %241, %247 : vector<4x12xf32>
    %c24 = arith.constant 24 : index
    %c0_66 = arith.constant 0 : index
    %249 = vector.load %arg12[%c24, %c0_66] : memref<32x128xf32, #tpu.memory_space<vmem>>, vector<4x128xf32>
    %cst_67 = arith.constant dense<0.000000e+00> : vector<4x128xf32>
    %250 = tpu.matmul %228, %9, %cst_67 {dimension_numbers = #tpu.dot_dimension_numbers<[1], [0], [0], [1], [0, 0, 1, 1], [], []>} : vector<4x12xf32>, vector<12x128xf32>, vector<4x128xf32> -> vector<4x128xf32>
    %251 = arith.addf %249, %250 : vector<4x128xf32>
    %252 = arith.negf %251 : vector<4x128xf32>
    %253 = math.exp %252 : vector<4x128xf32>
    %cst_68 = arith.constant 1.000000e+00 : f32
    %254 = vector.broadcast %cst_68 : f32 to vector<4x128xf32>
    %255 = arith.addf %254, %253 : vector<4x128xf32>
    %256 = arith.divf %254, %255 : vector<4x128xf32>
    %257 = vector.extract_strided_slice %256 {offsets = [0, 0], sizes = [4, 12], strides = [1, 1]} : vector<4x128xf32> to vector<4x12xf32>
    %258 = vector.extract_strided_slice %256 {offsets = [0, 32], sizes = [4, 12], strides = [1, 1]} : vector<4x128xf32> to vector<4x12xf32>
    %259 = vector.extract_strided_slice %256 {offsets = [0, 64], sizes = [4, 12], strides = [1, 1]} : vector<4x128xf32> to vector<4x12xf32>
    %260 = vector.extract_strided_slice %251 {offsets = [0, 96], sizes = [4, 12], strides = [1, 1]} : vector<4x128xf32> to vector<4x12xf32>
    %261 = math.tanh %260 : vector<4x12xf32>
    %262 = arith.mulf %258, %226 : vector<4x12xf32>
    %263 = arith.mulf %257, %261 : vector<4x12xf32>
    %264 = arith.addf %262, %263 : vector<4x12xf32>
    %265 = math.tanh %264 : vector<4x12xf32>
    %266 = arith.mulf %259, %265 : vector<4x12xf32>
    %cst_69 = arith.constant dense<0.000000e+00> : vector<4x128xf32>
    %267 = tpu.matmul %266, %10, %cst_69 {dimension_numbers = #tpu.dot_dimension_numbers<[1], [0], [0], [1], [0, 0, 1, 1], [], []>} : vector<4x12xf32>, vector<12x128xf32>, vector<4x128xf32> -> vector<4x128xf32>
    %cst_70 = arith.constant dense<0.000000e+00> : vector<4x128xf32>
    %268 = tpu.matmul %248, %11, %cst_70 {dimension_numbers = #tpu.dot_dimension_numbers<[1], [0], [0], [1], [0, 0, 1, 1], [], []>} : vector<4x12xf32>, vector<12x128xf32>, vector<4x128xf32> -> vector<4x128xf32>
    %269 = arith.addf %267, %268 : vector<4x128xf32>
    %270 = vector.broadcast %12 : vector<1x128xf32> to vector<4x128xf32>
    %271 = arith.addf %269, %270 : vector<4x128xf32>
    %272 = arith.negf %271 : vector<4x128xf32>
    %273 = math.exp %272 : vector<4x128xf32>
    %cst_71 = arith.constant 1.000000e+00 : f32
    %274 = vector.broadcast %cst_71 : f32 to vector<4x128xf32>
    %275 = arith.addf %274, %273 : vector<4x128xf32>
    %276 = arith.divf %274, %275 : vector<4x128xf32>
    %277 = vector.extract_strided_slice %276 {offsets = [0, 0], sizes = [4, 12], strides = [1, 1]} : vector<4x128xf32> to vector<4x12xf32>
    %278 = vector.extract_strided_slice %276 {offsets = [0, 32], sizes = [4, 12], strides = [1, 1]} : vector<4x128xf32> to vector<4x12xf32>
    %279 = vector.extract_strided_slice %276 {offsets = [0, 64], sizes = [4, 12], strides = [1, 1]} : vector<4x128xf32> to vector<4x12xf32>
    %280 = vector.extract_strided_slice %271 {offsets = [0, 96], sizes = [4, 12], strides = [1, 1]} : vector<4x128xf32> to vector<4x12xf32>
    %281 = math.tanh %280 : vector<4x12xf32>
    %282 = arith.mulf %278, %246 : vector<4x12xf32>
    %283 = arith.mulf %277, %281 : vector<4x12xf32>
    %284 = arith.addf %282, %283 : vector<4x12xf32>
    %285 = math.tanh %284 : vector<4x12xf32>
    %286 = arith.mulf %279, %285 : vector<4x12xf32>
    %c28 = arith.constant 28 : index
    %c0_72 = arith.constant 0 : index
    %287 = vector.load %arg12[%c28, %c0_72] : memref<32x128xf32, #tpu.memory_space<vmem>>, vector<4x128xf32>
    %cst_73 = arith.constant dense<0.000000e+00> : vector<4x128xf32>
    %288 = tpu.matmul %266, %9, %cst_73 {dimension_numbers = #tpu.dot_dimension_numbers<[1], [0], [0], [1], [0, 0, 1, 1], [], []>} : vector<4x12xf32>, vector<12x128xf32>, vector<4x128xf32> -> vector<4x128xf32>
    %289 = arith.addf %287, %288 : vector<4x128xf32>
    %290 = arith.negf %289 : vector<4x128xf32>
    %291 = math.exp %290 : vector<4x128xf32>
    %cst_74 = arith.constant 1.000000e+00 : f32
    %292 = vector.broadcast %cst_74 : f32 to vector<4x128xf32>
    %293 = arith.addf %292, %291 : vector<4x128xf32>
    %294 = arith.divf %292, %293 : vector<4x128xf32>
    %295 = vector.extract_strided_slice %294 {offsets = [0, 0], sizes = [4, 12], strides = [1, 1]} : vector<4x128xf32> to vector<4x12xf32>
    %296 = vector.extract_strided_slice %294 {offsets = [0, 32], sizes = [4, 12], strides = [1, 1]} : vector<4x128xf32> to vector<4x12xf32>
    %297 = vector.extract_strided_slice %294 {offsets = [0, 64], sizes = [4, 12], strides = [1, 1]} : vector<4x128xf32> to vector<4x12xf32>
    %298 = vector.extract_strided_slice %289 {offsets = [0, 96], sizes = [4, 12], strides = [1, 1]} : vector<4x128xf32> to vector<4x12xf32>
    %299 = math.tanh %298 : vector<4x12xf32>
    %300 = arith.mulf %296, %264 : vector<4x12xf32>
    %301 = arith.mulf %295, %299 : vector<4x12xf32>
    %302 = arith.addf %300, %301 : vector<4x12xf32>
    %303 = math.tanh %302 : vector<4x12xf32>
    %304 = arith.mulf %297, %303 : vector<4x12xf32>
    %cst_75 = arith.constant dense<0.000000e+00> : vector<4x128xf32>
    %305 = tpu.matmul %304, %10, %cst_75 {dimension_numbers = #tpu.dot_dimension_numbers<[1], [0], [0], [1], [0, 0, 1, 1], [], []>} : vector<4x12xf32>, vector<12x128xf32>, vector<4x128xf32> -> vector<4x128xf32>
    %cst_76 = arith.constant dense<0.000000e+00> : vector<4x128xf32>
    %306 = tpu.matmul %286, %11, %cst_76 {dimension_numbers = #tpu.dot_dimension_numbers<[1], [0], [0], [1], [0, 0, 1, 1], [], []>} : vector<4x12xf32>, vector<12x128xf32>, vector<4x128xf32> -> vector<4x128xf32>
    %307 = arith.addf %305, %306 : vector<4x128xf32>
    %308 = vector.broadcast %12 : vector<1x128xf32> to vector<4x128xf32>
    %309 = arith.addf %307, %308 : vector<4x128xf32>
    %310 = arith.negf %309 : vector<4x128xf32>
    %311 = math.exp %310 : vector<4x128xf32>
    %cst_77 = arith.constant 1.000000e+00 : f32
    %312 = vector.broadcast %cst_77 : f32 to vector<4x128xf32>
    %313 = arith.addf %312, %311 : vector<4x128xf32>
    %314 = arith.divf %312, %313 : vector<4x128xf32>
    %315 = vector.extract_strided_slice %314 {offsets = [0, 0], sizes = [4, 12], strides = [1, 1]} : vector<4x128xf32> to vector<4x12xf32>
    %316 = vector.extract_strided_slice %314 {offsets = [0, 32], sizes = [4, 12], strides = [1, 1]} : vector<4x128xf32> to vector<4x12xf32>
    %317 = vector.extract_strided_slice %314 {offsets = [0, 64], sizes = [4, 12], strides = [1, 1]} : vector<4x128xf32> to vector<4x12xf32>
    %318 = vector.extract_strided_slice %309 {offsets = [0, 96], sizes = [4, 12], strides = [1, 1]} : vector<4x128xf32> to vector<4x12xf32>
    %319 = math.tanh %318 : vector<4x12xf32>
    %320 = arith.mulf %316, %284 : vector<4x12xf32>
    %321 = arith.mulf %315, %319 : vector<4x12xf32>
    %322 = arith.addf %320, %321 : vector<4x12xf32>
    %323 = math.tanh %322 : vector<4x12xf32>
    %324 = arith.mulf %317, %323 : vector<4x12xf32>
    %c0_78 = arith.constant 0 : index
    %c0_79 = arith.constant 0 : index
    %325 = vector.load %arg7[%c0_78, %c0_79] : memref<12x1xf32, #tpu.memory_space<vmem>>, vector<12x1xf32>
    %cst_80 = arith.constant dense<0.000000e+00> : vector<4x1xf32>
    %326 = tpu.matmul %324, %325, %cst_80 {dimension_numbers = #tpu.dot_dimension_numbers<[1], [0], [0], [1], [0, 0, 1, 1], [], []>} : vector<4x12xf32>, vector<12x1xf32>, vector<4x1xf32> -> vector<4x1xf32>
    %c0_81 = arith.constant 0 : index
    %c0_82 = arith.constant 0 : index
    %327 = vector.load %arg8[%c0_81, %c0_82] : memref<1x1xf32, #tpu.memory_space<vmem>>, vector<1x1xf32>
    %328 = vector.broadcast %327 : vector<1x1xf32> to vector<4x1xf32>
    %329 = arith.addf %326, %328 : vector<4x1xf32>
    %c0_83 = arith.constant 0 : index
    %c0_84 = arith.constant 0 : index
    %330 = vector.load %arg11[%c0_83, %c0_84] : memref<4x128xf32, #tpu.memory_space<vmem>>, vector<4x1xf32>
    tpu.vector_store %arg11[%c0_83, %c0_84], %329 {strides = array<i32>} : memref<4x128xf32, #tpu.memory_space<vmem>>, vector<4x1xf32>,
    %c0_85 = arith.constant 0 : index
    %c16_86 = arith.constant 16 : index
    %331 = vector.load %arg11[%c0_85, %c16_86] : memref<4x128xf32, #tpu.memory_space<vmem>>, vector<4x12xf32>
    tpu.vector_store %arg11[%c0_85, %c16_86], %304 {strides = array<i32>} : memref<4x128xf32, #tpu.memory_space<vmem>>, vector<4x12xf32>,
    %c0_87 = arith.constant 0 : index
    %c32 = arith.constant 32 : index
    %332 = vector.load %arg11[%c0_87, %c32] : memref<4x128xf32, #tpu.memory_space<vmem>>, vector<4x12xf32>
    tpu.vector_store %arg11[%c0_87, %c32], %324 {strides = array<i32>} : memref<4x128xf32, #tpu.memory_space<vmem>>, vector<4x12xf32>,
    %c0_88 = arith.constant 0 : index
    %c48 = arith.constant 48 : index
    %333 = vector.load %arg11[%c0_88, %c48] : memref<4x128xf32, #tpu.memory_space<vmem>>, vector<4x12xf32>
    tpu.vector_store %arg11[%c0_88, %c48], %302 {strides = array<i32>} : memref<4x128xf32, #tpu.memory_space<vmem>>, vector<4x12xf32>,
    %c0_89 = arith.constant 0 : index
    %c64 = arith.constant 64 : index
    %334 = vector.load %arg11[%c0_89, %c64] : memref<4x128xf32, #tpu.memory_space<vmem>>, vector<4x12xf32>
    tpu.vector_store %arg11[%c0_89, %c64], %322 {strides = array<i32>} : memref<4x128xf32, #tpu.memory_space<vmem>>, vector<4x12xf32>,
    return
  }
}

</mosaic_0001>

<llo_original>
// kernel: tpu_custom_call.1
$region0: #{tpu_custom_call.1}
  #allocation0 [shape = 'u32[]', space=smem, size = 0x4, offset = 0x4, fixed_abs, tag = 'smem constant byte address 0x4 - core index']
  #allocation1 [shape = 'u32[144,128]{1,0:T(1,128)}', space=vmem, size = 0x12000, scoped, tag = 'internal scratch']
  #allocation2 [shape = 'f32[32,128]{1,0:T(8,128)}', space=vmem, size = 0x4000, scoped, tag = 'scratch operand']
  #allocation3 [shape = 'f32[1,1]{1,0:T(1,128)S(1)}', space=vmem, size = 0x200, scoped, tag = 'scoped memory for tpu_custom_call.1']
  %s0 = inlined_call_operand.vmem [shape: f32[32,10], index: 0, kind: input, shape index: {}]
  %s1 = inlined_call_operand.vmem [shape: f32[10,128], index: 1, kind: input, shape index: {}]
  %s2 = inlined_call_operand.vmem [shape: f32[12,128], index: 2, kind: input, shape index: {}]
  %s3 = inlined_call_operand.hbm [shape: f32[1,128], index: 3, kind: input, shape index: {}]
  %s4 = inlined_call_operand.vmem [shape: f32[12,128], index: 4, kind: input, shape index: {}]
  %s5 = inlined_call_operand.vmem [shape: f32[12,128], index: 5, kind: input, shape index: {}]
  %s6 = inlined_call_operand.vmem [shape: f32[1,128], index: 6, kind: input, shape index: {}]
  %s7 = inlined_call_operand.vmem [shape: f32[12,1], index: 7, kind: input, shape index: {}]
  %s8 = inlined_call_operand.<no memory space> [shape: f32[1,1], index: 8, kind: input, shape index: {}]
  %s9 = inlined_call_operand.vmem [shape: f32[2,4,12], index: 9, kind: input, shape index: {}]
  %s10 = inlined_call_operand.vmem [shape: f32[2,4,12], index: 10, kind: input, shape index: {}]
  %s11 = inlined_call_operand.hbm [shape: f32[4,128], index: 11, kind: output, shape index: {}]
  %s12 = sld [smem:[#allocation0]]
  $region58: #{tpu_custom_call.1} parent=0
    _
  %s14 = ssub.s32 1, %s12
  %s15 = scalar_select 0, %s14, %s12
  %v16 = vstv %s8
  %17 = vst [vmem:[#allocation3] sm:$0x1] %v16
  $region1: #{tpu_custom_call.1} parent=0
    #allocation4 [shape = 'u8[512]{0}', space=vmem, size = 0x400, scoped, tag = 'input window, operand 3, single buffered']
    #allocation5 [shape = 's32[1]{0}', space=sflag, size = 0x4, scoped, tag = 'scoped memory for tpu_custom_call.1']
    #allocation6 [shape = 's32[1]{0}', space=sflag, size = 0x4, scoped, tag = 'scoped memory for tpu_custom_call.1']
    #allocation7 [shape = 'u8[2048]{0}', space=vmem, size = 0x800, scoped, tag = 'output window, operand 0, single buffered']
    %18 = vsyncpa [#allocation5], 0
    %19 = vsyncpa [#allocation6], 0
    // Predicated region
    $region2: #{tpu_custom_call.1} parent=1 // pred_check
      _
    $region3: #{tpu_custom_call.1} parent=1 // pred_check_branch
      %21 = sbr.rel (0) target = $region5
    $region4: #{tpu_custom_call.1} parent=1 // pred_region
      _
    $region5: #{tpu_custom_call.1} parent=1 // pred_fallthru
      _
    // Predicated region
    $region6: #{tpu_custom_call.1} parent=1 // pred_check
      _
    $region7: #{tpu_custom_call.1} parent=1 // pred_check_branch
      %23 = sbr.rel (0) target = $region9
    $region8: #{tpu_custom_call.1} parent=1 // pred_region
      _
    $region9: #{tpu_custom_call.1} parent=1 // pred_fallthru
      _
    // Predicated region
    $region10: #{tpu_custom_call.1} parent=1 // pred_check
      _
    $region11: #{tpu_custom_call.1} parent=1 // pred_check_branch
      %25 = sbr.rel (0) target = $region13
    $region12: #{tpu_custom_call.1} parent=1 // pred_region
      _
    $region13: #{tpu_custom_call.1} parent=1 // pred_fallthru
      _
    // Predicated region
    $region14: #{tpu_custom_call.1} parent=1 // pred_check
      _
    $region15: #{tpu_custom_call.1} parent=1 // pred_check_branch
      %27 = sbr.rel (0) target = $region17
    $region16: #{tpu_custom_call.1} parent=1 // pred_region
      %s29 = ssub.s32 16, 16
      %30 = vsyncadd [#allocation5], %s29
      %s32 = sshll.u32 [#allocation4], 4
      %s33 = int_to_ptr.vmem [resolvable:$true] %s32
      %35 = dma.hbm_to_vmem [thread:$0]  %s3, 16, %s33, [#allocation5]
    $region17: #{tpu_custom_call.1} parent=1 // pred_fallthru
      _
    // Predicated region
    $region18: #{tpu_custom_call.1} parent=1 // pred_check
      _
    $region19: #{tpu_custom_call.1} parent=1 // pred_check_branch
      %37 = sbr.rel (0) target = $region21
    $region20: #{tpu_custom_call.1} parent=1 // pred_region
      _
    $region21: #{tpu_custom_call.1} parent=1 // pred_fallthru
      _
    // Predicated region
    $region22: #{tpu_custom_call.1} parent=1 // pred_check
      _
    $region23: #{tpu_custom_call.1} parent=1 // pred_check_branch
      %39 = sbr.rel (0) target = $region25
    $region24: #{tpu_custom_call.1} parent=1 // pred_region
      _
    $region25: #{tpu_custom_call.1} parent=1 // pred_fallthru
      _
    // Predicated region
    $region26: #{tpu_custom_call.1} parent=1 // pred_check
      _
    $region27: #{tpu_custom_call.1} parent=1 // pred_check_branch
      %41 = sbr.rel (0) target = $region29
    $region28: #{tpu_custom_call.1} parent=1 // pred_region
      _
    $region29: #{tpu_custom_call.1} parent=1 // pred_fallthru
      _
    // Predicated region
    $region30: #{tpu_custom_call.1} parent=1 // pred_check
      _
    $region31: #{tpu_custom_call.1} parent=1 // pred_check_branch
      %43 = sbr.rel (0) target = $region33
    $region32: #{tpu_custom_call.1} parent=1 // pred_region
      _
    $region33: #{tpu_custom_call.1} parent=1 // pred_fallthru
      _
    // Predicated region
    $region34: #{tpu_custom_call.1} parent=1 // pred_check
      _
    $region35: #{tpu_custom_call.1} parent=1 // pred_check_branch
      %45 = sbr.rel (0) target = $region37
    $region36: #{tpu_custom_call.1} parent=1 // pred_region
      _
    $region37: #{tpu_custom_call.1} parent=1 // pred_fallthru
      _
    // Predicated region
    $region38: #{tpu_custom_call.1} parent=1 // pred_check
      _
    $region39: #{tpu_custom_call.1} parent=1 // pred_check_branch
      %47 = sbr.rel (0) target = $region41
    $region40: #{tpu_custom_call.1} parent=1 // pred_region
      _
    $region41: #{tpu_custom_call.1} parent=1 // pred_fallthru
      _
    // Predicated region
    $region42: #{tpu_custom_call.1} parent=1 // pred_check
      _
    $region43: #{tpu_custom_call.1} parent=1 // pred_check_branch
      %49 = sbr.rel (0) target = $region45
    $region44: #{tpu_custom_call.1} parent=1 // pred_region
      _
    $region45: #{tpu_custom_call.1} parent=1 // pred_fallthru
      _
    // Predicated region
    $region46: #{tpu_custom_call.1} parent=1 // pred_check
      _
    $region47: #{tpu_custom_call.1} parent=1 // pred_check_branch
      %51 = sbr.rel (0) target = $region49
    $region48: #{tpu_custom_call.1} parent=1 // pred_region
      %52 = dma.done [#allocation5], 16
    $region49: #{tpu_custom_call.1} parent=1 // pred_fallthru
      _
    %53 = vst [vmem:[#allocation7] sm:$0xf] 0.0
    %v54 = vld [vmem:[%s0] sm:$0xff]
    %v55 = vld [vmem:[%s0 + $0x8] sm:$0xff]
    %v56 = vld [vmem:[%s0 + $0x10] sm:$0xff]
    %v57 = vld [vmem:[%s0 + $0x18] sm:$0xff]
    %v58 = vld [vmem:[%s1] sm:$0xff]
    %v59 = vld [vmem:[%s1 + $0x8] sm:$0x3]
    %v60 = vld [vmem:[#allocation4] sm:$0x1]
    %v62 = vlaneseq
    %v63 = vshrl.u32 %v62, 7
    %v64 = vsub.s32 0, %v63
    %v65 = vrot.slane %v60, %v64
    %vm67 = vcmask 80896
    %v69 = vsel %vm67, %v54, 0
    %v72 = vsel %vm67, %v55, 0
    %v75 = vsel %vm67, %v56, 0
    %v78 = vsel %vm67, %v57, 0
    %vm80 = vcmask 1041408
    %v82 = vsel %vm80, %v59, 0
    %84 = vmatprep.subr.mxu0 0.0
    %85 = vmatpush1.msra.mxu0 %v58
    %86 = vmatprep.subr.mxu0 0.0
    %87 = vmatpush1.msra.mxu0 %v82
    %88 = vmatprep.subr.mxu0 0.0
    %89 = vmatpush1.msra.mxu0 0.0
    %90 = vmatprep.subr.mxu0 0.0
    %91 = vmatpush1.msra.mxu0 0.0
    %92 = vmatprep.subr.mxu0 0.0
    %93 = vmatpush1.msra.mxu0 0.0
    %94 = vmatprep.subr.mxu0 0.0
    %95 = vmatpush1.msra.mxu0 0.0
    %96 = vmatprep.subr.mxu0 0.0
    %97 = vmatpush1.msra.mxu0 0.0
    %98 = vmatprep.subr.mxu0 0.0
    %99 = vmatpush1.msra.mxu0 0.0
    %100 = vmatprep.subr.mxu0 0.0
    %101 = vmatpush1.msra.mxu0 0.0
    %102 = vmatprep.subr.mxu0 0.0
    %103 = vmatpush1.msra.mxu0 0.0
    %104 = vmatprep.subr.mxu0 0.0
    %105 = vmatpush1.msra.mxu0 0.0
    %106 = vmatprep.subr.mxu0 0.0
    %107 = vmatpush1.msra.mxu0 0.0
    %108 = vmatprep.subr.mxu0 0.0
    %109 = vmatpush1.msra.mxu0 0.0
    %110 = vmatprep.subr.mxu0 0.0
    %111 = vmatpush1.msra.mxu0 0.0
    %112 = vmatprep.subr.mxu0 0.0
    %113 = vmatpush1.msra.mxu0 0.0
    %114 = vmatprep.subr.mxu0 0.0
    %115 = vmatpush1.msra.mxu0 0.0
    %116 = vmatprep.subr.mxu0 0.0
    %117 = vmatpush1.msra.mxu0 0.0
    %118 = vmatprep.subr.mxu0 0.0
    %119 = vmatpush1.msra.mxu0 0.0
    %120 = vmatprep.subr.mxu0 0.0
    %121 = vmatpush1.msra.mxu0 0.0
    %122 = vmatprep.subr.mxu0 0.0
    %123 = vmatpush1.msra.mxu0 0.0
    %124 = vmatprep.subr.mxu0 0.0
    %125 = vmatpush1.msra.mxu0 0.0
    %126 = vmatprep.subr.mxu0 0.0
    %127 = vmatpush1.msra.mxu0 0.0
    %128 = vmatprep.subr.mxu0 0.0
    %129 = vmatpush1.msra.mxu0 0.0
    %130 = vmatprep.subr.mxu0 0.0
    %131 = vmatpush1.msra.mxu0 0.0
    %132 = vmatprep.subr.mxu0 0.0
    %133 = vmatpush1.msra.mxu0 0.0
    %134 = vmatprep.subr.mxu0 0.0
    %135 = vmatpush1.msra.mxu0 0.0
    %136 = vmatprep.subr.mxu0 0.0
    %137 = vmatpush1.msra.mxu0 0.0
    %138 = vmatprep.subr.mxu0 0.0
    %139 = vmatpush1.msra.mxu0 0.0
    %140 = vmatprep.subr.mxu0 0.0
    %141 = vmatpush1.msra.mxu0 0.0
    %142 = vmatprep.subr.mxu0 0.0
    %143 = vmatpush1.msra.mxu0 0.0
    %144 = vmatprep.subr.mxu0 0.0
    %145 = vmatpush1.msra.mxu0 0.0
    %146 = vmatprep.subr.mxu0 0.0
    %147 = vmatpush1.msra.mxu0 0.0
    %148 = vmatprep.mubr.f32.mxu0 0.0
    %149 = vmatmul.mubr.f32.gmra.mrb[0].mxu0 %v69
    %v150 = vpop.f32.mrb[0].mxu0
    %v151 = vadd.f32 %v65, %v150
    %v152 = vpop.f32.mrb[0].mxu0
    %153 = vmatprep.mubr.f32.mxu0 0.0
    %154 = vmatmul.mubr.f32.gmra.mrb[0].mxu0 %v72
    %v155 = vpop.f32.mrb[0].mxu0
    %v156 = vadd.f32 %v65, %v155
    %v157 = vpop.f32.mrb[0].mxu0
    %158 = vmatprep.mubr.f32.mxu0 0.0
    %159 = vmatmul.mubr.f32.gmra.mrb[0].mxu0 %v75
    %v160 = vpop.f32.mrb[0].mxu0
    %v161 = vadd.f32 %v65, %v160
    %v162 = vpop.f32.mrb[0].mxu0
    %163 = vmatprep.mubr.f32.mxu0 0.0
    %164 = vmatmul.mubr.f32.gmra.mrb[0].mxu0 %v78
    %v165 = vpop.f32.mrb[0].mxu0
    %v166 = vadd.f32 %v65, %v165
    %v167 = vpop.f32.mrb[0].mxu0
    %168 = vdwg.mxu0
    %169 = vst [vmem:[#allocation2] sm:$0xff] %v151
    %170 = vst [vmem:[#allocation2 + $0x8] sm:$0xff] %v156
    %171 = vst [vmem:[#allocation2 + $0x10] sm:$0xff] %v161
    %172 = vst [vmem:[#allocation2 + $0x18] sm:$0xff] %v166
    %v173 = vld [vmem:[%s2] sm:$0xff]
    %v174 = vld [vmem:[%s2 + $0x8] sm:$0xf]
    %v175 = vld [vmem:[%s4] sm:$0xff]
    %v176 = vld [vmem:[%s4 + $0x8] sm:$0xf]
    %v177 = vld [vmem:[%s5] sm:$0xff]
    %v178 = vld [vmem:[%s5 + $0x8] sm:$0xf]
    %v179 = vld [vmem:[%s6] sm:$0x1]
    %v180 = vld [vmem:[%s9] sm:$0xf]
    %v181 = vld [vmem:[%s10] sm:$0xf]
    %s182 = scalar_lea.vmem %s9, 4
    %v183 = vld [vmem:[%s182] sm:$0xf]
    %s184 = scalar_lea.vmem %s10, 4
    %v185 = vld [vmem:[%s184] sm:$0xf]
    %v186 = vld [vmem:[#allocation2] sm:$0xf]
    %vm187 = vcmask 97280
    %v189 = vsel %vm187, %v180, 0
    %vm191 = vcmask 1043456
    %v193 = vsel %vm191, %v174, 0
    %195 = vmatprep.subr.mxu0 0.0
    %196 = vmatpush1.msra.mxu0 %v173
    %197 = vmatprep.subr.mxu0 0.0
    %198 = vmatpush1.msra.mxu0 %v193
    %199 = vmatprep.subr.mxu0 0.0
    %200 = vmatpush1.msra.mxu0 0.0
    %201 = vmatprep.subr.mxu0 0.0
    %202 = vmatpush1.msra.mxu0 0.0
    %203 = vmatprep.subr.mxu0 0.0
    %204 = vmatpush1.msra.mxu0 0.0
    %205 = vmatprep.subr.mxu0 0.0
    %206 = vmatpush1.msra.mxu0 0.0
    %207 = vmatprep.subr.mxu0 0.0
    %208 = vmatpush1.msra.mxu0 0.0
    %209 = vmatprep.subr.mxu0 0.0
    %210 = vmatpush1.msra.mxu0 0.0
    %211 = vmatprep.subr.mxu0 0.0
    %212 = vmatpush1.msra.mxu0 0.0
    %213 = vmatprep.subr.mxu0 0.0
    %214 = vmatpush1.msra.mxu0 0.0
    %215 = vmatprep.subr.mxu0 0.0
    %216 = vmatpush1.msra.mxu0 0.0
    %217 = vmatprep.subr.mxu0 0.0
    %218 = vmatpush1.msra.mxu0 0.0
    %219 = vmatprep.subr.mxu0 0.0
    %220 = vmatpush1.msra.mxu0 0.0
    %221 = vmatprep.subr.mxu0 0.0
    %222 = vmatpush1.msra.mxu0 0.0
    %223 = vmatprep.subr.mxu0 0.0
    %224 = vmatpush1.msra.mxu0 0.0
    %225 = vmatprep.subr.mxu0 0.0
    %226 = vmatpush1.msra.mxu0 0.0
    %227 = vmatprep.subr.mxu0 0.0
    %228 = vmatpush1.msra.mxu0 0.0
    %229 = vmatprep.subr.mxu0 0.0
    %230 = vmatpush1.msra.mxu0 0.0
    %231 = vmatprep.subr.mxu0 0.0
    %232 = vmatpush1.msra.mxu0 0.0
    %233 = vmatprep.subr.mxu0 0.0
    %234 = vmatpush1.msra.mxu0 0.0
    %235 = vmatprep.subr.mxu0 0.0
    %236 = vmatpush1.msra.mxu0 0.0
    %237 = vmatprep.subr.mxu0 0.0
    %238 = vmatpush1.msra.mxu0 0.0
    %239 = vmatprep.subr.mxu0 0.0
    %240 = vmatpush1.msra.mxu0 0.0
    %241 = vmatprep.subr.mxu0 0.0
    %242 = vmatpush1.msra.mxu0 0.0
    %243 = vmatprep.subr.mxu0 0.0
    %244 = vmatpush1.msra.mxu0 0.0
    %245 = vmatprep.subr.mxu0 0.0
    %246 = vmatpush1.msra.mxu0 0.0
    %247 = vmatprep.subr.mxu0 0.0
    %248 = vmatpush1.msra.mxu0 0.0
    %249 = vmatprep.subr.mxu0 0.0
    %250 = vmatpush1.msra.mxu0 0.0
    %251 = vmatprep.subr.mxu0 0.0
    %252 = vmatpush1.msra.mxu0 0.0
    %253 = vmatprep.subr.mxu0 0.0
    %254 = vmatpush1.msra.mxu0 0.0
    %255 = vmatprep.subr.mxu0 0.0
    %256 = vmatpush1.msra.mxu0 0.0
    %257 = vmatprep.subr.mxu0 0.0
    %258 = vmatpush1.msra.mxu0 0.0
    %259 = vmatprep.mubr.f32.mxu0 0.0
    %260 = vmatmul.mubr.f32.gmra.mrb[0].mxu0 %v189
    %v261 = vpop.f32.mrb[0].mxu0
    %v262 = vadd.f32 0.0, %v261
    %v263 = vpop.f32.mrb[0].mxu0
    %264 = vdwg.mxu0
    %v265 = vadd.f32 %v186, %v262
    %v266 = vxor.u32 %v265, 2147483648
    %v267 = vmul.f32 %v266, 1.442695
    %v268 = vpow.pop %v267
    %v269 = vadd.f32 %v268, 1.0
    %v270 = vrcp.pop %v269
    %v271 = vmul.f32 1.0, %v270
    %v272 = vtanh.pop %v265
    %274 = vrot.lane.b32.xlu0 %v181, 32
    %v275 = vpop.permute.xlu0 %274
    %v277 = vmul.f32 %v271, %v275
    %279 = vrot.lane.b32.xlu0 %v272, 32
    %v280 = vpop.permute.xlu0 %279
    %v282 = vmul.f32 %v271, %v280
    %284 = vrot.lane.b32.xlu0 %v282, 32
    %v285 = vpop.permute.xlu0 %284
    %v287 = vadd.f32 %v277, %v285
    %v288 = vtanh.pop %v287
    %290 = vrot.lane.b32.xlu0 %v288, 32
    %v291 = vpop.permute.xlu0 %290
    %v293 = vmul.f32 %v271, %v291
    %v295 = vsel %vm187, %v183, 0
    %v298 = vsel %vm191, %v178, 0
    %300 = vmatprep.subr.mxu0 0.0
    %301 = vmatpush1.msra.mxu0 %v177
    %302 = vmatprep.subr.mxu0 0.0
    %303 = vmatpush1.msra.mxu0 %v298
    %304 = vmatprep.subr.mxu0 0.0
    %305 = vmatpush1.msra.mxu0 0.0
    %306 = vmatprep.subr.mxu0 0.0
    %307 = vmatpush1.msra.mxu0 0.0
    %308 = vmatprep.subr.mxu0 0.0
    %309 = vmatpush1.msra.mxu0 0.0
    %310 = vmatprep.subr.mxu0 0.0
    %311 = vmatpush1.msra.mxu0 0.0
    %312 = vmatprep.subr.mxu0 0.0
    %313 = vmatpush1.msra.mxu0 0.0
    %314 = vmatprep.subr.mxu0 0.0
    %315 = vmatpush1.msra.mxu0 0.0
    %316 = vmatprep.subr.mxu0 0.0
    %317 = vmatpush1.msra.mxu0 0.0
    %318 = vmatprep.subr.mxu0 0.0
    %319 = vmatpush1.msra.mxu0 0.0
    %320 = vmatprep.subr.mxu0 0.0
    %321 = vmatpush1.msra.mxu0 0.0
    %322 = vmatprep.subr.mxu0 0.0
    %323 = vmatpush1.msra.mxu0 0.0
    %324 = vmatprep.subr.mxu0 0.0
    %325 = vmatpush1.msra.mxu0 0.0
    %326 = vmatprep.subr.mxu0 0.0
    %327 = vmatpush1.msra.mxu0 0.0
    %328 = vmatprep.subr.mxu0 0.0
    %329 = vmatpush1.msra.mxu0 0.0
    %330 = vmatprep.subr.mxu0 0.0
    %331 = vmatpush1.msra.mxu0 0.0
    %332 = vmatprep.subr.mxu0 0.0
    %333 = vmatpush1.msra.mxu0 0.0
    %334 = vmatprep.subr.mxu0 0.0
    %335 = vmatpush1.msra.mxu0 0.0
    %336 = vmatprep.subr.mxu0 0.0
    %337 = vmatpush1.msra.mxu0 0.0
    %338 = vmatprep.subr.mxu0 0.0
    %339 = vmatpush1.msra.mxu0 0.0
    %340 = vmatprep.subr.mxu0 0.0
    %341 = vmatpush1.msra.mxu0 0.0
    %342 = vmatprep.subr.mxu0 0.0
    %343 = vmatpush1.msra.mxu0 0.0
    %344 = vmatprep.subr.mxu0 0.0
    %345 = vmatpush1.msra.mxu0 0.0
    %346 = vmatprep.subr.mxu0 0.0
    %347 = vmatpush1.msra.mxu0 0.0
    %348 = vmatprep.subr.mxu0 0.0
    %349 = vmatpush1.msra.mxu0 0.0
    %350 = vmatprep.subr.mxu0 0.0
    %351 = vmatpush1.msra.mxu0 0.0
    %352 = vmatprep.subr.mxu0 0.0
    %353 = vmatpush1.msra.mxu0 0.0
    %354 = vmatprep.subr.mxu0 0.0
    %355 = vmatpush1.msra.mxu0 0.0
    %356 = vmatprep.subr.mxu0 0.0
    %357 = vmatpush1.msra.mxu0 0.0
    %358 = vmatprep.subr.mxu0 0.0
    %359 = vmatpush1.msra.mxu0 0.0
    %360 = vmatprep.subr.mxu0 0.0
    %361 = vmatpush1.msra.mxu0 0.0
    %362 = vmatprep.subr.mxu0 0.0
    %363 = vmatpush1.msra.mxu0 0.0
    %364 = vmatprep.mubr.f32.mxu0 0.0
    %365 = vmatmul.mubr.f32.gmra.mrb[0].mxu0 %v295
    %v366 = vpop.f32.mrb[0].mxu0
    %v367 = vadd.f32 0.0, %v366
    %v368 = vpop.f32.mrb[0].mxu0
    %369 = vdwg.mxu0
    %371 = vrot.lane.b32.xlu0 %v293, 64
    %v372 = vpop.permute.xlu0 %371
    %v373 = vsel %vm187, %v372, 0
    %v376 = vsel %vm191, %v176, 0
    %378 = vmatprep.subr.mxu0 0.0
    %379 = vmatpush1.msra.mxu0 %v175
    %380 = vmatprep.subr.mxu0 0.0
    %381 = vmatpush1.msra.mxu0 %v376
    %382 = vmatprep.subr.mxu0 0.0
    %383 = vmatpush1.msra.mxu0 0.0
    %384 = vmatprep.subr.mxu0 0.0
    %385 = vmatpush1.msra.mxu0 0.0
    %386 = vmatprep.subr.mxu0 0.0
    %387 = vmatpush1.msra.mxu0 0.0
    %388 = vmatprep.subr.mxu0 0.0
    %389 = vmatpush1.msra.mxu0 0.0
    %390 = vmatprep.subr.mxu0 0.0
    %391 = vmatpush1.msra.mxu0 0.0
    %392 = vmatprep.subr.mxu0 0.0
    %393 = vmatpush1.msra.mxu0 0.0
    %394 = vmatprep.subr.mxu0 0.0
    %395 = vmatpush1.msra.mxu0 0.0
    %396 = vmatprep.subr.mxu0 0.0
    %397 = vmatpush1.msra.mxu0 0.0
    %398 = vmatprep.subr.mxu0 0.0
    %399 = vmatpush1.msra.mxu0 0.0
    %400 = vmatprep.subr.mxu0 0.0
    %401 = vmatpush1.msra.mxu0 0.0
    %402 = vmatprep.subr.mxu0 0.0
    %403 = vmatpush1.msra.mxu0 0.0
    %404 = vmatprep.subr.mxu0 0.0
    %405 = vmatpush1.msra.mxu0 0.0
    %406 = vmatprep.subr.mxu0 0.0
    %407 = vmatpush1.msra.mxu0 0.0
    %408 = vmatprep.subr.mxu0 0.0
    %409 = vmatpush1.msra.mxu0 0.0
    %410 = vmatprep.subr.mxu0 0.0
    %411 = vmatpush1.msra.mxu0 0.0
    %412 = vmatprep.subr.mxu0 0.0
    %413 = vmatpush1.msra.mxu0 0.0
    %414 = vmatprep.subr.mxu0 0.0
    %415 = vmatpush1.msra.mxu0 0.0
    %416 = vmatprep.subr.mxu0 0.0
    %417 = vmatpush1.msra.mxu0 0.0
    %418 = vmatprep.subr.mxu0 0.0
    %419 = vmatpush1.msra.mxu0 0.0
    %420 = vmatprep.subr.mxu0 0.0
    %421 = vmatpush1.msra.mxu0 0.0
    %422 = vmatprep.subr.mxu0 0.0
    %423 = vmatpush1.msra.mxu0 0.0
    %424 = vmatprep.subr.mxu0 0.0
    %425 = vmatpush1.msra.mxu0 0.0
    %426 = vmatprep.subr.mxu0 0.0
    %427 = vmatpush1.msra.mxu0 0.0
    %428 = vmatprep.subr.mxu0 0.0
    %429 = vmatpush1.msra.mxu0 0.0
    %430 = vmatprep.subr.mxu0 0.0
    %431 = vmatpush1.msra.mxu0 0.0
    %432 = vmatprep.subr.mxu0 0.0
    %433 = vmatpush1.msra.mxu0 0.0
    %434 = vmatprep.subr.mxu0 0.0
    %435 = vmatpush1.msra.mxu0 0.0
    %436 = vmatprep.subr.mxu0 0.0
    %437 = vmatpush1.msra.mxu0 0.0
    %438 = vmatprep.subr.mxu0 0.0
    %439 = vmatpush1.msra.mxu0 0.0
    %440 = vmatprep.subr.mxu0 0.0
    %441 = vmatpush1.msra.mxu0 0.0
    %442 = vmatprep.mubr.f32.mxu0 0.0
    %443 = vmatmul.mubr.f32.gmra.mrb[0].mxu0 %v373
    %v444 = vpop.f32.mrb[0].mxu0
    %v445 = vadd.f32 %v367, %v444
    %v446 = vpop.f32.mrb[0].mxu0
    %447 = vdwg.mxu0
    %v449 = vlaneseq
    %v450 = vshrl.u32 %v449, 7
    %v451 = vsub.s32 0, %v450
    %v452 = vrot.slane %v179, %v451
    %v454 = vadd.f32 %v445, %v452
    %v455 = vxor.u32 %v454, 2147483648
    %v456 = vmul.f32 %v455, 1.442695
    %v457 = vpow.pop %v456
    %v458 = vadd.f32 %v457, 1.0
    %v459 = vrcp.pop %v458
    %v460 = vmul.f32 1.0, %v459
    %v461 = vtanh.pop %v454
    %463 = vrot.lane.b32.xlu0 %v185, 32
    %v464 = vpop.permute.xlu0 %463
    %v466 = vmul.f32 %v460, %v464
    %468 = vrot.lane.b32.xlu0 %v461, 32
    %v469 = vpop.permute.xlu0 %468
    %v471 = vmul.f32 %v460, %v469
    %473 = vrot.lane.b32.xlu0 %v471, 32
    %v474 = vpop.permute.xlu0 %473
    %v476 = vadd.f32 %v466, %v474
    %v477 = vtanh.pop %v476
    %479 = vrot.lane.b32.xlu0 %v477, 32
    %v480 = vpop.permute.xlu0 %479
    %v482 = vmul.f32 %v460, %v480
    %v483 = vld [vmem:[#allocation2 + $0x4] sm:$0xf]
    %484 = vmatprep.subr.mxu0 0.0
    %485 = vmatpush1.msra.mxu0 %v173
    %486 = vmatprep.subr.mxu0 0.0
    %487 = vmatpush1.msra.mxu0 %v193
    %488 = vmatprep.subr.mxu0 0.0
    %489 = vmatpush1.msra.mxu0 0.0
    %490 = vmatprep.subr.mxu0 0.0
    %491 = vmatpush1.msra.mxu0 0.0
    %492 = vmatprep.subr.mxu0 0.0
    %493 = vmatpush1.msra.mxu0 0.0
    %494 = vmatprep.subr.mxu0 0.0
    %495 = vmatpush1.msra.mxu0 0.0
    %496 = vmatprep.subr.mxu0 0.0
    %497 = vmatpush1.msra.mxu0 0.0
    %498 = vmatprep.subr.mxu0 0.0
    %499 = vmatpush1.msra.mxu0 0.0
    %500 = vmatprep.subr.mxu0 0.0
    %501 = vmatpush1.msra.mxu0 0.0
    %502 = vmatprep.subr.mxu0 0.0
    %503 = vmatpush1.msra.mxu0 0.0
    %504 = vmatprep.subr.mxu0 0.0
    %505 = vmatpush1.msra.mxu0 0.0
    %506 = vmatprep.subr.mxu0 0.0
    %507 = vmatpush1.msra.mxu0 0.0
    %508 = vmatprep.subr.mxu0 0.0
    %509 = vmatpush1.msra.mxu0 0.0
    %510 = vmatprep.subr.mxu0 0.0
    %511 = vmatpush1.msra.mxu0 0.0
    %512 = vmatprep.subr.mxu0 0.0
    %513 = vmatpush1.msra.mxu0 0.0
    %514 = vmatprep.subr.mxu0 0.0
    %515 = vmatpush1.msra.mxu0 0.0
    %516 = vmatprep.subr.mxu0 0.0
    %517 = vmatpush1.msra.mxu0 0.0
    %518 = vmatprep.subr.mxu0 0.0
    %519 = vmatpush1.msra.mxu0 0.0
    %520 = vmatprep.subr.mxu0 0.0
    %521 = vmatpush1.msra.mxu0 0.0
    %522 = vmatprep.subr.mxu0 0.0
    %523 = vmatpush1.msra.mxu0 0.0
    %524 = vmatprep.subr.mxu0 0.0
    %525 = vmatpush1.msra.mxu0 0.0
    %526 = vmatprep.subr.mxu0 0.0
    %527 = vmatpush1.msra.mxu0 0.0
    %528 = vmatprep.subr.mxu0 0.0
    %529 = vmatpush1.msra.mxu0 0.0
    %530 = vmatprep.subr.mxu0 0.0
    %531 = vmatpush1.msra.mxu0 0.0
    %532 = vmatprep.subr.mxu0 0.0
    %533 = vmatpush1.msra.mxu0 0.0
    %534 = vmatprep.subr.mxu0 0.0
    %535 = vmatpush1.msra.mxu0 0.0
    %536 = vmatprep.subr.mxu0 0.0
    %537 = vmatpush1.msra.mxu0 0.0
    %538 = vmatprep.subr.mxu0 0.0
    %539 = vmatpush1.msra.mxu0 0.0
    %540 = vmatprep.subr.mxu0 0.0
    %541 = vmatpush1.msra.mxu0 0.0
    %542 = vmatprep.subr.mxu0 0.0
    %543 = vmatpush1.msra.mxu0 0.0
    %544 = vmatprep.subr.mxu0 0.0
    %545 = vmatpush1.msra.mxu0 0.0
    %546 = vmatprep.subr.mxu0 0.0
    %547 = vmatpush1.msra.mxu0 0.0
    %548 = vmatprep.mubr.f32.mxu0 0.0
    %549 = vmatmul.mubr.f32.gmra.mrb[0].mxu0 %v373
    %v550 = vpop.f32.mrb[0].mxu0
    %v551 = vadd.f32 0.0, %v550
    %v552 = vpop.f32.mrb[0].mxu0
    %553 = vdwg.mxu0
    %v554 = vadd.f32 %v483, %v551
    %v555 = vxor.u32 %v554, 2147483648
    %v556 = vmul.f32 %v555, 1.442695
    %v557 = vpow.pop %v556
    %v558 = vadd.f32 %v557, 1.0
    %v559 = vrcp.pop %v558
    %v560 = vmul.f32 1.0, %v559
    %v561 = vtanh.pop %v554
    %v562 = vmul.f32 %v560, %v287
    %564 = vrot.lane.b32.xlu0 %v561, 32
    %v565 = vpop.permute.xlu0 %564
    %v567 = vmul.f32 %v560, %v565
    %569 = vrot.lane.b32.xlu0 %v567, 32
    %v570 = vpop.permute.xlu0 %569
    %v572 = vadd.f32 %v562, %v570
    %v573 = vtanh.pop %v572
    %575 = vrot.lane.b32.xlu0 %v573, 32
    %v576 = vpop.permute.xlu0 %575
    %v578 = vmul.f32 %v560, %v576
    %580 = vrot.lane.b32.xlu0 %v482, 64
    %v581 = vpop.permute.xlu0 %580
    %v582 = vsel %vm187, %v581, 0
    %584 = vmatprep.subr.mxu0 0.0
    %585 = vmatpush1.msra.mxu0 %v177
    %586 = vmatprep.subr.mxu0 0.0
    %587 = vmatpush1.msra.mxu0 %v298
    %588 = vmatprep.subr.mxu0 0.0
    %589 = vmatpush1.msra.mxu0 0.0
    %590 = vmatprep.subr.mxu0 0.0
    %591 = vmatpush1.msra.mxu0 0.0
    %592 = vmatprep.subr.mxu0 0.0
    %593 = vmatpush1.msra.mxu0 0.0
    %594 = vmatprep.subr.mxu0 0.0
    %595 = vmatpush1.msra.mxu0 0.0
    %596 = vmatprep.subr.mxu0 0.0
    %597 = vmatpush1.msra.mxu0 0.0
    %598 = vmatprep.subr.mxu0 0.0
    %599 = vmatpush1.msra.mxu0 0.0
    %600 = vmatprep.subr.mxu0 0.0
    %601 = vmatpush1.msra.mxu0 0.0
    %602 = vmatprep.subr.mxu0 0.0
    %603 = vmatpush1.msra.mxu0 0.0
    %604 = vmatprep.subr.mxu0 0.0
    %605 = vmatpush1.msra.mxu0 0.0
    %606 = vmatprep.subr.mxu0 0.0
    %607 = vmatpush1.msra.mxu0 0.0
    %608 = vmatprep.subr.mxu0 0.0
    %609 = vmatpush1.msra.mxu0 0.0
    %610 = vmatprep.subr.mxu0 0.0
    %611 = vmatpush1.msra.mxu0 0.0
    %612 = vmatprep.subr.mxu0 0.0
    %613 = vmatpush1.msra.mxu0 0.0
    %614 = vmatprep.subr.mxu0 0.0
    %615 = vmatpush1.msra.mxu0 0.0
    %616 = vmatprep.subr.mxu0 0.0
    %617 = vmatpush1.msra.mxu0 0.0
    %618 = vmatprep.subr.mxu0 0.0
    %619 = vmatpush1.msra.mxu0 0.0
    %620 = vmatprep.subr.mxu0 0.0
    %621 = vmatpush1.msra.mxu0 0.0
    %622 = vmatprep.subr.mxu0 0.0
    %623 = vmatpush1.msra.mxu0 0.0
    %624 = vmatprep.subr.mxu0 0.0
    %625 = vmatpush1.msra.mxu0 0.0
    %626 = vmatprep.subr.mxu0 0.0
    %627 = vmatpush1.msra.mxu0 0.0
    %628 = vmatprep.subr.mxu0 0.0
    %629 = vmatpush1.msra.mxu0 0.0
    %630 = vmatprep.subr.mxu0 0.0
    %631 = vmatpush1.msra.mxu0 0.0
    %632 = vmatprep.subr.mxu0 0.0
    %633 = vmatpush1.msra.mxu0 0.0
    %634 = vmatprep.subr.mxu0 0.0
    %635 = vmatpush1.msra.mxu0 0.0
    %636 = vmatprep.subr.mxu0 0.0
    %637 = vmatpush1.msra.mxu0 0.0
    %638 = vmatprep.subr.mxu0 0.0
    %639 = vmatpush1.msra.mxu0 0.0
    %640 = vmatprep.subr.mxu0 0.0
    %641 = vmatpush1.msra.mxu0 0.0
    %642 = vmatprep.subr.mxu0 0.0
    %643 = vmatpush1.msra.mxu0 0.0
    %644 = vmatprep.subr.mxu0 0.0
    %645 = vmatpush1.msra.mxu0 0.0
    %646 = vmatprep.subr.mxu0 0.0
    %647 = vmatpush1.msra.mxu0 0.0
    %648 = vmatprep.mubr.f32.mxu0 0.0
    %649 = vmatmul.mubr.f32.gmra.mrb[0].mxu0 %v582
    %v650 = vpop.f32.mrb[0].mxu0
    %v651 = vadd.f32 0.0, %v650
    %v652 = vpop.f32.mrb[0].mxu0
    %653 = vdwg.mxu0
    %655 = vrot.lane.b32.xlu0 %v578, 64
    %v656 = vpop.permute.xlu0 %655
    %v657 = vsel %vm187, %v656, 0
    %659 = vmatprep.subr.mxu0 0.0
    %660 = vmatpush1.msra.mxu0 %v175
    %661 = vmatprep.subr.mxu0 0.0
    %662 = vmatpush1.msra.mxu0 %v376
    %663 = vmatprep.subr.mxu0 0.0
    %664 = vmatpush1.msra.mxu0 0.0
    %665 = vmatprep.subr.mxu0 0.0
    %666 = vmatpush1.msra.mxu0 0.0
    %667 = vmatprep.subr.mxu0 0.0
    %668 = vmatpush1.msra.mxu0 0.0
    %669 = vmatprep.subr.mxu0 0.0
    %670 = vmatpush1.msra.mxu0 0.0
    %671 = vmatprep.subr.mxu0 0.0
    %672 = vmatpush1.msra.mxu0 0.0
    %673 = vmatprep.subr.mxu0 0.0
    %674 = vmatpush1.msra.mxu0 0.0
    %675 = vmatprep.subr.mxu0 0.0
    %676 = vmatpush1.msra.mxu0 0.0
    %677 = vmatprep.subr.mxu0 0.0
    %678 = vmatpush1.msra.mxu0 0.0
    %679 = vmatprep.subr.mxu0 0.0
    %680 = vmatpush1.msra.mxu0 0.0
    %681 = vmatprep.subr.mxu0 0.0
    %682 = vmatpush1.msra.mxu0 0.0
    %683 = vmatprep.subr.mxu0 0.0
    %684 = vmatpush1.msra.mxu0 0.0
    %685 = vmatprep.subr.mxu0 0.0
    %686 = vmatpush1.msra.mxu0 0.0
    %687 = vmatprep.subr.mxu0 0.0
    %688 = vmatpush1.msra.mxu0 0.0
    %689 = vmatprep.subr.mxu0 0.0
    %690 = vmatpush1.msra.mxu0 0.0
    %691 = vmatprep.subr.mxu0 0.0
    %692 = vmatpush1.msra.mxu0 0.0
    %693 = vmatprep.subr.mxu0 0.0
    %694 = vmatpush1.msra.mxu0 0.0
    %695 = vmatprep.subr.mxu0 0.0
    %696 = vmatpush1.msra.mxu0 0.0
    %697 = vmatprep.subr.mxu0 0.0
    %698 = vmatpush1.msra.mxu0 0.0
    %699 = vmatprep.subr.mxu0 0.0
    %700 = vmatpush1.msra.mxu0 0.0
    %701 = vmatprep.subr.mxu0 0.0
    %702 = vmatpush1.msra.mxu0 0.0
    %703 = vmatprep.subr.mxu0 0.0
    %704 = vmatpush1.msra.mxu0 0.0
    %705 = vmatprep.subr.mxu0 0.0
    %706 = vmatpush1.msra.mxu0 0.0
    %707 = vmatprep.subr.mxu0 0.0
    %708 = vmatpush1.msra.mxu0 0.0
    %709 = vmatprep.subr.mxu0 0.0
    %710 = vmatpush1.msra.mxu0 0.0
    %711 = vmatprep.subr.mxu0 0.0
    %712 = vmatpush1.msra.mxu0 0.0
    %713 = vmatprep.subr.mxu0 0.0
    %714 = vmatpush1.msra.mxu0 0.0
    %715 = vmatprep.subr.mxu0 0.0
    %716 = vmatpush1.msra.mxu0 0.0
    %717 = vmatprep.subr.mxu0 0.0
    %718 = vmatpush1.msra.mxu0 0.0
    %719 = vmatprep.subr.mxu0 0.0
    %720 = vmatpush1.msra.mxu0 0.0
    %721 = vmatprep.subr.mxu0 0.0
    %722 = vmatpush1.msra.mxu0 0.0
    %723 = vmatprep.mubr.f32.mxu0 0.0
    %724 = vmatmul.mubr.f32.gmra.mrb[0].mxu0 %v657
    %v725 = vpop.f32.mrb[0].mxu0
    %v726 = vadd.f32 %v651, %v725
    %v727 = vpop.f32.mrb[0].mxu0
    %728 = vdwg.mxu0
    %v729 = vadd.f32 %v726, %v452
    %v730 = vxor.u32 %v729, 2147483648
    %v731 = vmul.f32 %v730, 1.442695
    %v732 = vpow.pop %v731
    %v733 = vadd.f32 %v732, 1.0
    %v734 = vrcp.pop %v733
    %v735 = vmul.f32 1.0, %v734
    %v736 = vtanh.pop %v729
    %v737 = vmul.f32 %v735, %v476
    %739 = vrot.lane.b32.xlu0 %v736, 32
    %v740 = vpop.permute.xlu0 %739
    %v742 = vmul.f32 %v735, %v740
    %744 = vrot.lane.b32.xlu0 %v742, 32
    %v745 = vpop.permute.xlu0 %744
    %v747 = vadd.f32 %v737, %v745
    %v748 = vtanh.pop %v747
    %750 = vrot.lane.b32.xlu0 %v748, 32
    %v751 = vpop.permute.xlu0 %750
    %v753 = vmul.f32 %v735, %v751
    %v754 = vld [vmem:[#allocation2 + $0x8] sm:$0xf]
    %755 = vmatprep.subr.mxu0 0.0
    %756 = vmatpush1.msra.mxu0 %v173
    %757 = vmatprep.subr.mxu0 0.0
    %758 = vmatpush1.msra.mxu0 %v193
    %759 = vmatprep.subr.mxu0 0.0
    %760 = vmatpush1.msra.mxu0 0.0
    %761 = vmatprep.subr.mxu0 0.0
    %762 = vmatpush1.msra.mxu0 0.0
    %763 = vmatprep.subr.mxu0 0.0
    %764 = vmatpush1.msra.mxu0 0.0
    %765 = vmatprep.subr.mxu0 0.0
    %766 = vmatpush1.msra.mxu0 0.0
    %767 = vmatprep.subr.mxu0 0.0
    %768 = vmatpush1.msra.mxu0 0.0
    %769 = vmatprep.subr.mxu0 0.0
    %770 = vmatpush1.msra.mxu0 0.0
    %771 = vmatprep.subr.mxu0 0.0
    %772 = vmatpush1.msra.mxu0 0.0
    %773 = vmatprep.subr.mxu0 0.0
    %774 = vmatpush1.msra.mxu0 0.0
    %775 = vmatprep.subr.mxu0 0.0
    %776 = vmatpush1.msra.mxu0 0.0
    %777 = vmatprep.subr.mxu0 0.0
    %778 = vmatpush1.msra.mxu0 0.0
    %779 = vmatprep.subr.mxu0 0.0
    %780 = vmatpush1.msra.mxu0 0.0
    %781 = vmatprep.subr.mxu0 0.0
    %782 = vmatpush1.msra.mxu0 0.0
    %783 = vmatprep.subr.mxu0 0.0
    %784 = vmatpush1.msra.mxu0 0.0
    %785 = vmatprep.subr.mxu0 0.0
    %786 = vmatpush1.msra.mxu0 0.0
    %787 = vmatprep.subr.mxu0 0.0
    %788 = vmatpush1.msra.mxu0 0.0
    %789 = vmatprep.subr.mxu0 0.0
    %790 = vmatpush1.msra.mxu0 0.0
    %791 = vmatprep.subr.mxu0 0.0
    %792 = vmatpush1.msra.mxu0 0.0
    %793 = vmatprep.subr.mxu0 0.0
    %794 = vmatpush1.msra.mxu0 0.0
    %795 = vmatprep.subr.mxu0 0.0
    %796 = vmatpush1.msra.mxu0 0.0
    %797 = vmatprep.subr.mxu0 0.0
    %798 = vmatpush1.msra.mxu0 0.0
    %799 = vmatprep.subr.mxu0 0.0
    %800 = vmatpush1.msra.mxu0 0.0
    %801 = vmatprep.subr.mxu0 0.0
    %802 = vmatpush1.msra.mxu0 0.0
    %803 = vmatprep.subr.mxu0 0.0
    %804 = vmatpush1.msra.mxu0 0.0
    %805 = vmatprep.subr.mxu0 0.0
    %806 = vmatpush1.msra.mxu0 0.0
    %807 = vmatprep.subr.mxu0 0.0
    %808 = vmatpush1.msra.mxu0 0.0
    %809 = vmatprep.subr.mxu0 0.0
    %810 = vmatpush1.msra.mxu0 0.0
    %811 = vmatprep.subr.mxu0 0.0
    %812 = vmatpush1.msra.mxu0 0.0
    %813 = vmatprep.subr.mxu0 0.0
    %814 = vmatpush1.msra.mxu0 0.0
    %815 = vmatprep.subr.mxu0 0.0
    %816 = vmatpush1.msra.mxu0 0.0
    %817 = vmatprep.subr.mxu0 0.0
    %818 = vmatpush1.msra.mxu0 0.0
    %819 = vmatprep.mubr.f32.mxu0 0.0
    %820 = vmatmul.mubr.f32.gmra.mrb[0].mxu0 %v657
    %v821 = vpop.f32.mrb[0].mxu0
    %v822 = vadd.f32 0.0, %v821
    %v823 = vpop.f32.mrb[0].mxu0
    %824 = vdwg.mxu0
    %v825 = vadd.f32 %v754, %v822
    %v826 = vxor.u32 %v825, 2147483648
    %v827 = vmul.f32 %v826, 1.442695
    %v828 = vpow.pop %v827
    %v829 = vadd.f32 %v828, 1.0
    %v830 = vrcp.pop %v829
    %v831 = vmul.f32 1.0, %v830
    %v832 = vtanh.pop %v825
    %v833 = vmul.f32 %v831, %v572
    %835 = vrot.lane.b32.xlu0 %v832, 32
    %v836 = vpop.permute.xlu0 %835
    %v838 = vmul.f32 %v831, %v836
    %840 = vrot.lane.b32.xlu0 %v838, 32
    %v841 = vpop.permute.xlu0 %840
    %v843 = vadd.f32 %v833, %v841
    %v844 = vtanh.pop %v843
    %846 = vrot.lane.b32.xlu0 %v844, 32
    %v847 = vpop.permute.xlu0 %846
    %v849 = vmul.f32 %v831, %v847
    %851 = vrot.lane.b32.xlu0 %v753, 64
    %v852 = vpop.permute.xlu0 %851
    %v853 = vsel %vm187, %v852, 0
    %855 = vmatprep.subr.mxu0 0.0
    %856 = vmatpush1.msra.mxu0 %v177
    %857 = vmatprep.subr.mxu0 0.0
    %858 = vmatpush1.msra.mxu0 %v298
    %859 = vmatprep.subr.mxu0 0.0
    %860 = vmatpush1.msra.mxu0 0.0
    %861 = vmatprep.subr.mxu0 0.0
    %862 = vmatpush1.msra.mxu0 0.0
    %863 = vmatprep.subr.mxu0 0.0
    %864 = vmatpush1.msra.mxu0 0.0
    %865 = vmatprep.subr.mxu0 0.0
    %866 = vmatpush1.msra.mxu0 0.0
    %867 = vmatprep.subr.mxu0 0.0
    %868 = vmatpush1.msra.mxu0 0.0
    %869 = vmatprep.subr.mxu0 0.0
    %870 = vmatpush1.msra.mxu0 0.0
    %871 = vmatprep.subr.mxu0 0.0
    %872 = vmatpush1.msra.mxu0 0.0
    %873 = vmatprep.subr.mxu0 0.0
    %874 = vmatpush1.msra.mxu0 0.0
    %875 = vmatprep.subr.mxu0 0.0
    %876 = vmatpush1.msra.mxu0 0.0
    %877 = vmatprep.subr.mxu0 0.0
    %878 = vmatpush1.msra.mxu0 0.0
    %879 = vmatprep.subr.mxu0 0.0
    %880 = vmatpush1.msra.mxu0 0.0
    %881 = vmatprep.subr.mxu0 0.0
    %882 = vmatpush1.msra.mxu0 0.0
    %883 = vmatprep.subr.mxu0 0.0
    %884 = vmatpush1.msra.mxu0 0.0
    %885 = vmatprep.subr.mxu0 0.0
    %886 = vmatpush1.msra.mxu0 0.0
    %887 = vmatprep.subr.mxu0 0.0
    %888 = vmatpush1.msra.mxu0 0.0
    %889 = vmatprep.subr.mxu0 0.0
    %890 = vmatpush1.msra.mxu0 0.0
    %891 = vmatprep.subr.mxu0 0.0
    %892 = vmatpush1.msra.mxu0 0.0
    %893 = vmatprep.subr.mxu0 0.0
    %894 = vmatpush1.msra.mxu0 0.0
    %895 = vmatprep.subr.mxu0 0.0
    %896 = vmatpush1.msra.mxu0 0.0
    %897 = vmatprep.subr.mxu0 0.0
    %898 = vmatpush1.msra.mxu0 0.0
    %899 = vmatprep.subr.mxu0 0.0
    %900 = vmatpush1.msra.mxu0 0.0
    %901 = vmatprep.subr.mxu0 0.0
    %902 = vmatpush1.msra.mxu0 0.0
    %903 = vmatprep.subr.mxu0 0.0
    %904 = vmatpush1.msra.mxu0 0.0
    %905 = vmatprep.subr.mxu0 0.0
    %906 = vmatpush1.msra.mxu0 0.0
    %907 = vmatprep.subr.mxu0 0.0
    %908 = vmatpush1.msra.mxu0 0.0
    %909 = vmatprep.subr.mxu0 0.0
    %910 = vmatpush1.msra.mxu0 0.0
    %911 = vmatprep.subr.mxu0 0.0
    %912 = vmatpush1.msra.mxu0 0.0
    %913 = vmatprep.subr.mxu0 0.0
    %914 = vmatpush1.msra.mxu0 0.0
    %915 = vmatprep.subr.mxu0 0.0
    %916 = vmatpush1.msra.mxu0 0.0
    %917 = vmatprep.subr.mxu0 0.0
    %918 = vmatpush1.msra.mxu0 0.0
    %919 = vmatprep.mubr.f32.mxu0 0.0
    %920 = vmatmul.mubr.f32.gmra.mrb[0].mxu0 %v853
    %v921 = vpop.f32.mrb[0].mxu0
    %v922 = vadd.f32 0.0, %v921
    %v923 = vpop.f32.mrb[0].mxu0
    %924 = vdwg.mxu0
    %926 = vrot.lane.b32.xlu0 %v849, 64
    %v927 = vpop.permute.xlu0 %926
    %v928 = vsel %vm187, %v927, 0
    %930 = vmatprep.subr.mxu0 0.0
    %931 = vmatpush1.msra.mxu0 %v175
    %932 = vmatprep.subr.mxu0 0.0
    %933 = vmatpush1.msra.mxu0 %v376
    %934 = vmatprep.subr.mxu0 0.0
    %935 = vmatpush1.msra.mxu0 0.0
    %936 = vmatprep.subr.mxu0 0.0
    %937 = vmatpush1.msra.mxu0 0.0
    %938 = vmatprep.subr.mxu0 0.0
    %939 = vmatpush1.msra.mxu0 0.0
    %940 = vmatprep.subr.mxu0 0.0
    %941 = vmatpush1.msra.mxu0 0.0
    %942 = vmatprep.subr.mxu0 0.0
    %943 = vmatpush1.msra.mxu0 0.0
    %944 = vmatprep.subr.mxu0 0.0
    %945 = vmatpush1.msra.mxu0 0.0
    %946 = vmatprep.subr.mxu0 0.0
    %947 = vmatpush1.msra.mxu0 0.0
    %948 = vmatprep.subr.mxu0 0.0
    %949 = vmatpush1.msra.mxu0 0.0
    %950 = vmatprep.subr.mxu0 0.0
    %951 = vmatpush1.msra.mxu0 0.0
    %952 = vmatprep.subr.mxu0 0.0
    %953 = vmatpush1.msra.mxu0 0.0
    %954 = vmatprep.subr.mxu0 0.0
    %955 = vmatpush1.msra.mxu0 0.0
    %956 = vmatprep.subr.mxu0 0.0
    %957 = vmatpush1.msra.mxu0 0.0
    %958 = vmatprep.subr.mxu0 0.0
    %959 = vmatpush1.msra.mxu0 0.0
    %960 = vmatprep.subr.mxu0 0.0
    %961 = vmatpush1.msra.mxu0 0.0
    %962 = vmatprep.subr.mxu0 0.0
    %963 = vmatpush1.msra.mxu0 0.0
    %964 = vmatprep.subr.mxu0 0.0
    %965 = vmatpush1.msra.mxu0 0.0
    %966 = vmatprep.subr.mxu0 0.0
    %967 = vmatpush1.msra.mxu0 0.0
    %968 = vmatprep.subr.mxu0 0.0
    %969 = vmatpush1.msra.mxu0 0.0
    %970 = vmatprep.subr.mxu0 0.0
    %971 = vmatpush1.msra.mxu0 0.0
    %972 = vmatprep.subr.mxu0 0.0
    %973 = vmatpush1.msra.mxu0 0.0
    %974 = vmatprep.subr.mxu0 0.0
    %975 = vmatpush1.msra.mxu0 0.0
    %976 = vmatprep.subr.mxu0 0.0
    %977 = vmatpush1.msra.mxu0 0.0
    %978 = vmatprep.subr.mxu0 0.0
    %979 = vmatpush1.msra.mxu0 0.0
    %980 = vmatprep.subr.mxu0 0.0
    %981 = vmatpush1.msra.mxu0 0.0
    %982 = vmatprep.subr.mxu0 0.0
    %983 = vmatpush1.msra.mxu0 0.0
    %984 = vmatprep.subr.mxu0 0.0
    %985 = vmatpush1.msra.mxu0 0.0
    %986 = vmatprep.subr.mxu0 0.0
    %987 = vmatpush1.msra.mxu0 0.0
    %988 = vmatprep.subr.mxu0 0.0
    %989 = vmatpush1.msra.mxu0 0.0
    %990 = vmatprep.subr.mxu0 0.0
    %991 = vmatpush1.msra.mxu0 0.0
    %992 = vmatprep.subr.mxu0 0.0
    %993 = vmatpush1.msra.mxu0 0.0
    %994 = vmatprep.mubr.f32.mxu0 0.0
    %995 = vmatmul.mubr.f32.gmra.mrb[0].mxu0 %v928
    %v996 = vpop.f32.mrb[0].mxu0
    %v997 = vadd.f32 %v922, %v996
    %v998 = vpop.f32.mrb[0].mxu0
    %999 = vdwg.mxu0
    %v1000 = vadd.f32 %v997, %v452
    %v1001 = vxor.u32 %v1000, 2147483648
    %v1002 = vmul.f32 %v1001, 1.442695
    %v1003 = vpow.pop %v1002
    %v1004 = vadd.f32 %v1003, 1.0
    %v1005 = vrcp.pop %v1004
    %v1006 = vmul.f32 1.0, %v1005
    %v1007 = vtanh.pop %v1000
    %v1008 = vmul.f32 %v1006, %v747
    %1010 = vrot.lane.b32.xlu0 %v1007, 32
    %v1011 = vpop.permute.xlu0 %1010
    %v1013 = vmul.f32 %v1006, %v1011
    %1015 = vrot.lane.b32.xlu0 %v1013, 32
    %v1016 = vpop.permute.xlu0 %1015
    %v1018 = vadd.f32 %v1008, %v1016
    %v1019 = vtanh.pop %v1018
    %1021 = vrot.lane.b32.xlu0 %v1019, 32
    %v1022 = vpop.permute.xlu0 %1021
    %v1024 = vmul.f32 %v1006, %v1022
    %v1025 = vld [vmem:[#allocation2 + $0xc] sm:$0xf]
    %1026 = vmatprep.subr.mxu0 0.0
    %1027 = vmatpush1.msra.mxu0 %v173
    %1028 = vmatprep.subr.mxu0 0.0
    %1029 = vmatpush1.msra.mxu0 %v193
    %1030 = vmatprep.subr.mxu0 0.0
    %1031 = vmatpush1.msra.mxu0 0.0
    %1032 = vmatprep.subr.mxu0 0.0
    %1033 = vmatpush1.msra.mxu0 0.0
    %1034 = vmatprep.subr.mxu0 0.0
    %1035 = vmatpush1.msra.mxu0 0.0
    %1036 = vmatprep.subr.mxu0 0.0
    %1037 = vmatpush1.msra.mxu0 0.0
    %1038 = vmatprep.subr.mxu0 0.0
    %1039 = vmatpush1.msra.mxu0 0.0
    %1040 = vmatprep.subr.mxu0 0.0
    %1041 = vmatpush1.msra.mxu0 0.0
    %1042 = vmatprep.subr.mxu0 0.0
    %1043 = vmatpush1.msra.mxu0 0.0
    %1044 = vmatprep.subr.mxu0 0.0
    %1045 = vmatpush1.msra.mxu0 0.0
    %1046 = vmatprep.subr.mxu0 0.0
    %1047 = vmatpush1.msra.mxu0 0.0
    %1048 = vmatprep.subr.mxu0 0.0
    %1049 = vmatpush1.msra.mxu0 0.0
    %1050 = vmatprep.subr.mxu0 0.0
    %1051 = vmatpush1.msra.mxu0 0.0
    %1052 = vmatprep.subr.mxu0 0.0
    %1053 = vmatpush1.msra.mxu0 0.0
    %1054 = vmatprep.subr.mxu0 0.0
    %1055 = vmatpush1.msra.mxu0 0.0
    %1056 = vmatprep.subr.mxu0 0.0
    %1057 = vmatpush1.msra.mxu0 0.0
    %1058 = vmatprep.subr.mxu0 0.0
    %1059 = vmatpush1.msra.mxu0 0.0
    %1060 = vmatprep.subr.mxu0 0.0
    %1061 = vmatpush1.msra.mxu0 0.0
    %1062 = vmatprep.subr.mxu0 0.0
    %1063 = vmatpush1.msra.mxu0 0.0
    %1064 = vmatprep.subr.mxu0 0.0
    %1065 = vmatpush1.msra.mxu0 0.0
    %1066 = vmatprep.subr.mxu0 0.0
    %1067 = vmatpush1.msra.mxu0 0.0
    %1068 = vmatprep.subr.mxu0 0.0
    %1069 = vmatpush1.msra.mxu0 0.0
    %1070 = vmatprep.subr.mxu0 0.0
    %1071 = vmatpush1.msra.mxu0 0.0
    %1072 = vmatprep.subr.mxu0 0.0
    %1073 = vmatpush1.msra.mxu0 0.0
    %1074 = vmatprep.subr.mxu0 0.0
    %1075 = vmatpush1.msra.mxu0 0.0
    %1076 = vmatprep.subr.mxu0 0.0
    %1077 = vmatpush1.msra.mxu0 0.0
    %1078 = vmatprep.subr.mxu0 0.0
    %1079 = vmatpush1.msra.mxu0 0.0
    %1080 = vmatprep.subr.mxu0 0.0
    %1081 = vmatpush1.msra.mxu0 0.0
    %1082 = vmatprep.subr.mxu0 0.0
    %1083 = vmatpush1.msra.mxu0 0.0
    %1084 = vmatprep.subr.mxu0 0.0
    %1085 = vmatpush1.msra.mxu0 0.0
    %1086 = vmatprep.subr.mxu0 0.0
    %1087 = vmatpush1.msra.mxu0 0.0
    %1088 = vmatprep.subr.mxu0 0.0
    %1089 = vmatpush1.msra.mxu0 0.0
    %1090 = vmatprep.mubr.f32.mxu0 0.0
    %1091 = vmatmul.mubr.f32.gmra.mrb[0].mxu0 %v928
    %v1092 = vpop.f32.mrb[0].mxu0
    %v1093 = vadd.f32 0.0, %v1092
    %v1094 = vpop.f32.mrb[0].mxu0
    %1095 = vdwg.mxu0
    %v1096 = vadd.f32 %v1025, %v1093
    %v1097 = vxor.u32 %v1096, 2147483648
    %v1098 = vmul.f32 %v1097, 1.442695
    %v1099 = vpow.pop %v1098
    %v1100 = vadd.f32 %v1099, 1.0
    %v1101 = vrcp.pop %v1100
    %v1102 = vmul.f32 1.0, %v1101
    %v1103 = vtanh.pop %v1096
    %v1104 = vmul.f32 %v1102, %v843
    %1106 = vrot.lane.b32.xlu0 %v1103, 32
    %v1107 = vpop.permute.xlu0 %1106
    %v1109 = vmul.f32 %v1102, %v1107
    %1111 = vrot.lane.b32.xlu0 %v1109, 32
    %v1112 = vpop.permute.xlu0 %1111
    %v1114 = vadd.f32 %v1104, %v1112
    %v1115 = vtanh.pop %v1114
    %1117 = vrot.lane.b32.xlu0 %v1115, 32
    %v1118 = vpop.permute.xlu0 %1117
    %v1120 = vmul.f32 %v1102, %v1118
    %1122 = vrot.lane.b32.xlu0 %v1024, 64
    %v1123 = vpop.permute.xlu0 %1122
    %v1124 = vsel %vm187, %v1123, 0
    %1126 = vmatprep.subr.mxu0 0.0
    %1127 = vmatpush1.msra.mxu0 %v177
    %1128 = vmatprep.subr.mxu0 0.0
    %1129 = vmatpush1.msra.mxu0 %v298
    %1130 = vmatprep.subr.mxu0 0.0
    %1131 = vmatpush1.msra.mxu0 0.0
    %1132 = vmatprep.subr.mxu0 0.0
    %1133 = vmatpush1.msra.mxu0 0.0
    %1134 = vmatprep.subr.mxu0 0.0
    %1135 = vmatpush1.msra.mxu0 0.0
    %1136 = vmatprep.subr.mxu0 0.0
    %1137 = vmatpush1.msra.mxu0 0.0
    %1138 = vmatprep.subr.mxu0 0.0
    %1139 = vmatpush1.msra.mxu0 0.0
    %1140 = vmatprep.subr.mxu0 0.0
    %1141 = vmatpush1.msra.mxu0 0.0
    %1142 = vmatprep.subr.mxu0 0.0
    %1143 = vmatpush1.msra.mxu0 0.0
    %1144 = vmatprep.subr.mxu0 0.0
    %1145 = vmatpush1.msra.mxu0 0.0
    %1146 = vmatprep.subr.mxu0 0.0
    %1147 = vmatpush1.msra.mxu0 0.0
    %1148 = vmatprep.subr.mxu0 0.0
    %1149 = vmatpush1.msra.mxu0 0.0
    %1150 = vmatprep.subr.mxu0 0.0
    %1151 = vmatpush1.msra.mxu0 0.0
    %1152 = vmatprep.subr.mxu0 0.0
    %1153 = vmatpush1.msra.mxu0 0.0
    %1154 = vmatprep.subr.mxu0 0.0
    %1155 = vmatpush1.msra.mxu0 0.0
    %1156 = vmatprep.subr.mxu0 0.0
    %1157 = vmatpush1.msra.mxu0 0.0
    %1158 = vmatprep.subr.mxu0 0.0
    %1159 = vmatpush1.msra.mxu0 0.0
    %1160 = vmatprep.subr.mxu0 0.0
    %1161 = vmatpush1.msra.mxu0 0.0
    %1162 = vmatprep.subr.mxu0 0.0
    %1163 = vmatpush1.msra.mxu0 0.0
    %1164 = vmatprep.subr.mxu0 0.0
    %1165 = vmatpush1.msra.mxu0 0.0
    %1166 = vmatprep.subr.mxu0 0.0
    %1167 = vmatpush1.msra.mxu0 0.0
    %1168 = vmatprep.subr.mxu0 0.0
    %1169 = vmatpush1.msra.mxu0 0.0
    %1170 = vmatprep.subr.mxu0 0.0
    %1171 = vmatpush1.msra.mxu0 0.0
    %1172 = vmatprep.subr.mxu0 0.0
    %1173 = vmatpush1.msra.mxu0 0.0
    %1174 = vmatprep.subr.mxu0 0.0
    %1175 = vmatpush1.msra.mxu0 0.0
    %1176 = vmatprep.subr.mxu0 0.0
    %1177 = vmatpush1.msra.mxu0 0.0
    %1178 = vmatprep.subr.mxu0 0.0
    %1179 = vmatpush1.msra.mxu0 0.0
    %1180 = vmatprep.subr.mxu0 0.0
    %1181 = vmatpush1.msra.mxu0 0.0
    %1182 = vmatprep.subr.mxu0 0.0
    %1183 = vmatpush1.msra.mxu0 0.0
    %1184 = vmatprep.subr.mxu0 0.0
    %1185 = vmatpush1.msra.mxu0 0.0
    %1186 = vmatprep.subr.mxu0 0.0
    %1187 = vmatpush1.msra.mxu0 0.0
    %1188 = vmatprep.subr.mxu0 0.0
    %1189 = vmatpush1.msra.mxu0 0.0
    %1190 = vmatprep.mubr.f32.mxu0 0.0
    %1191 = vmatmul.mubr.f32.gmra.mrb[0].mxu0 %v1124
    %v1192 = vpop.f32.mrb[0].mxu0
    %v1193 = vadd.f32 0.0, %v1192
    %v1194 = vpop.f32.mrb[0].mxu0
    %1195 = vdwg.mxu0
    %1197 = vrot.lane.b32.xlu0 %v1120, 64
    %v1198 = vpop.permute.xlu0 %1197
    %v1199 = vsel %vm187, %v1198, 0
    %1201 = vmatprep.subr.mxu0 0.0
    %1202 = vmatpush1.msra.mxu0 %v175
    %1203 = vmatprep.subr.mxu0 0.0
    %1204 = vmatpush1.msra.mxu0 %v376
    %1205 = vmatprep.subr.mxu0 0.0
    %1206 = vmatpush1.msra.mxu0 0.0
    %1207 = vmatprep.subr.mxu0 0.0
    %1208 = vmatpush1.msra.mxu0 0.0
    %1209 = vmatprep.subr.mxu0 0.0
    %1210 = vmatpush1.msra.mxu0 0.0
    %1211 = vmatprep.subr.mxu0 0.0
    %1212 = vmatpush1.msra.mxu0 0.0
    %1213 = vmatprep.subr.mxu0 0.0
    %1214 = vmatpush1.msra.mxu0 0.0
    %1215 = vmatprep.subr.mxu0 0.0
    %1216 = vmatpush1.msra.mxu0 0.0
    %1217 = vmatprep.subr.mxu0 0.0
    %1218 = vmatpush1.msra.mxu0 0.0
    %1219 = vmatprep.subr.mxu0 0.0
    %1220 = vmatpush1.msra.mxu0 0.0
    %1221 = vmatprep.subr.mxu0 0.0
    %1222 = vmatpush1.msra.mxu0 0.0
    %1223 = vmatprep.subr.mxu0 0.0
    %1224 = vmatpush1.msra.mxu0 0.0
    %1225 = vmatprep.subr.mxu0 0.0
    %1226 = vmatpush1.msra.mxu0 0.0
    %1227 = vmatprep.subr.mxu0 0.0
    %1228 = vmatpush1.msra.mxu0 0.0
    %1229 = vmatprep.subr.mxu0 0.0
    %1230 = vmatpush1.msra.mxu0 0.0
    %1231 = vmatprep.subr.mxu0 0.0
    %1232 = vmatpush1.msra.mxu0 0.0
    %1233 = vmatprep.subr.mxu0 0.0
    %1234 = vmatpush1.msra.mxu0 0.0
    %1235 = vmatprep.subr.mxu0 0.0
    %1236 = vmatpush1.msra.mxu0 0.0
    %1237 = vmatprep.subr.mxu0 0.0
    %1238 = vmatpush1.msra.mxu0 0.0
    %1239 = vmatprep.subr.mxu0 0.0
    %1240 = vmatpush1.msra.mxu0 0.0
    %1241 = vmatprep.subr.mxu0 0.0
    %1242 = vmatpush1.msra.mxu0 0.0
    %1243 = vmatprep.subr.mxu0 0.0
    %1244 = vmatpush1.msra.mxu0 0.0
    %1245 = vmatprep.subr.mxu0 0.0
    %1246 = vmatpush1.msra.mxu0 0.0
    %1247 = vmatprep.subr.mxu0 0.0
    %1248 = vmatpush1.msra.mxu0 0.0
    %1249 = vmatprep.subr.mxu0 0.0
    %1250 = vmatpush1.msra.mxu0 0.0
    %1251 = vmatprep.subr.mxu0 0.0
    %1252 = vmatpush1.msra.mxu0 0.0
    %1253 = vmatprep.subr.mxu0 0.0
    %1254 = vmatpush1.msra.mxu0 0.0
    %1255 = vmatprep.subr.mxu0 0.0
    %1256 = vmatpush1.msra.mxu0 0.0
    %1257 = vmatprep.subr.mxu0 0.0
    %1258 = vmatpush1.msra.mxu0 0.0
    %1259 = vmatprep.subr.mxu0 0.0
    %1260 = vmatpush1.msra.mxu0 0.0
    %1261 = vmatprep.subr.mxu0 0.0
    %1262 = vmatpush1.msra.mxu0 0.0
    %1263 = vmatprep.subr.mxu0 0.0
    %1264 = vmatpush1.msra.mxu0 0.0
    %1265 = vmatprep.mubr.f32.mxu0 0.0
    %1266 = vmatmul.mubr.f32.gmra.mrb[0].mxu0 %v1199
    %v1267 = vpop.f32.mrb[0].mxu0
    %v1268 = vadd.f32 %v1193, %v1267
    %v1269 = vpop.f32.mrb[0].mxu0
    %1270 = vdwg.mxu0
    %v1271 = vadd.f32 %v1268, %v452
    %v1272 = vxor.u32 %v1271, 2147483648
    %v1273 = vmul.f32 %v1272, 1.442695
    %v1274 = vpow.pop %v1273
    %v1275 = vadd.f32 %v1274, 1.0
    %v1276 = vrcp.pop %v1275
    %v1277 = vmul.f32 1.0, %v1276
    %v1278 = vtanh.pop %v1271
    %v1279 = vmul.f32 %v1277, %v1018
    %1281 = vrot.lane.b32.xlu0 %v1278, 32
    %v1282 = vpop.permute.xlu0 %1281
    %v1284 = vmul.f32 %v1277, %v1282
    %1286 = vrot.lane.b32.xlu0 %v1284, 32
    %v1287 = vpop.permute.xlu0 %1286
    %v1289 = vadd.f32 %v1279, %v1287
    %v1290 = vtanh.pop %v1289
    %1292 = vrot.lane.b32.xlu0 %v1290, 32
    %v1293 = vpop.permute.xlu0 %1292
    %v1295 = vmul.f32 %v1277, %v1293
    %v1296 = vld [vmem:[#allocation2 + $0x10] sm:$0xf]
    %1297 = vmatprep.subr.mxu0 0.0
    %1298 = vmatpush1.msra.mxu0 %v173
    %1299 = vmatprep.subr.mxu0 0.0
    %1300 = vmatpush1.msra.mxu0 %v193
    %1301 = vmatprep.subr.mxu0 0.0
    %1302 = vmatpush1.msra.mxu0 0.0
    %1303 = vmatprep.subr.mxu0 0.0
    %1304 = vmatpush1.msra.mxu0 0.0
    %1305 = vmatprep.subr.mxu0 0.0
    %1306 = vmatpush1.msra.mxu0 0.0
    %1307 = vmatprep.subr.mxu0 0.0
    %1308 = vmatpush1.msra.mxu0 0.0
    %1309 = vmatprep.subr.mxu0 0.0
    %1310 = vmatpush1.msra.mxu0 0.0
    %1311 = vmatprep.subr.mxu0 0.0
    %1312 = vmatpush1.msra.mxu0 0.0
    %1313 = vmatprep.subr.mxu0 0.0
    %1314 = vmatpush1.msra.mxu0 0.0
    %1315 = vmatprep.subr.mxu0 0.0
    %1316 = vmatpush1.msra.mxu0 0.0
    %1317 = vmatprep.subr.mxu0 0.0
    %1318 = vmatpush1.msra.mxu0 0.0
    %1319 = vmatprep.subr.mxu0 0.0
    %1320 = vmatpush1.msra.mxu0 0.0
    %1321 = vmatprep.subr.mxu0 0.0
    %1322 = vmatpush1.msra.mxu0 0.0
    %1323 = vmatprep.subr.mxu0 0.0
    %1324 = vmatpush1.msra.mxu0 0.0
    %1325 = vmatprep.subr.mxu0 0.0
    %1326 = vmatpush1.msra.mxu0 0.0
    %1327 = vmatprep.subr.mxu0 0.0
    %1328 = vmatpush1.msra.mxu0 0.0
    %1329 = vmatprep.subr.mxu0 0.0
    %1330 = vmatpush1.msra.mxu0 0.0
    %1331 = vmatprep.subr.mxu0 0.0
    %1332 = vmatpush1.msra.mxu0 0.0
    %1333 = vmatprep.subr.mxu0 0.0
    %1334 = vmatpush1.msra.mxu0 0.0
    %1335 = vmatprep.subr.mxu0 0.0
    %1336 = vmatpush1.msra.mxu0 0.0
    %1337 = vmatprep.subr.mxu0 0.0
    %1338 = vmatpush1.msra.mxu0 0.0
    %1339 = vmatprep.subr.mxu0 0.0
    %1340 = vmatpush1.msra.mxu0 0.0
    %1341 = vmatprep.subr.mxu0 0.0
    %1342 = vmatpush1.msra.mxu0 0.0
    %1343 = vmatprep.subr.mxu0 0.0
    %1344 = vmatpush1.msra.mxu0 0.0
    %1345 = vmatprep.subr.mxu0 0.0
    %1346 = vmatpush1.msra.mxu0 0.0
    %1347 = vmatprep.subr.mxu0 0.0
    %1348 = vmatpush1.msra.mxu0 0.0
    %1349 = vmatprep.subr.mxu0 0.0
    %1350 = vmatpush1.msra.mxu0 0.0
    %1351 = vmatprep.subr.mxu0 0.0
    %1352 = vmatpush1.msra.mxu0 0.0
    %1353 = vmatprep.subr.mxu0 0.0
    %1354 = vmatpush1.msra.mxu0 0.0
    %1355 = vmatprep.subr.mxu0 0.0
    %1356 = vmatpush1.msra.mxu0 0.0
    %1357 = vmatprep.subr.mxu0 0.0
    %1358 = vmatpush1.msra.mxu0 0.0
    %1359 = vmatprep.subr.mxu0 0.0
    %1360 = vmatpush1.msra.mxu0 0.0
    %1361 = vmatprep.mubr.f32.mxu0 0.0
    %1362 = vmatmul.mubr.f32.gmra.mrb[0].mxu0 %v1199
    %v1363 = vpop.f32.mrb[0].mxu0
    %v1364 = vadd.f32 0.0, %v1363
    %v1365 = vpop.f32.mrb[0].mxu0
    %1366 = vdwg.mxu0
    %v1367 = vadd.f32 %v1296, %v1364
    %v1368 = vxor.u32 %v1367, 2147483648
    %v1369 = vmul.f32 %v1368, 1.442695
    %v1370 = vpow.pop %v1369
    %v1371 = vadd.f32 %v1370, 1.0
    %v1372 = vrcp.pop %v1371
    %v1373 = vmul.f32 1.0, %v1372
    %v1374 = vtanh.pop %v1367
    %v1375 = vmul.f32 %v1373, %v1114
    %1377 = vrot.lane.b32.xlu0 %v1374, 32
    %v1378 = vpop.permute.xlu0 %1377
    %v1380 = vmul.f32 %v1373, %v1378
    %1382 = vrot.lane.b32.xlu0 %v1380, 32
    %v1383 = vpop.permute.xlu0 %1382
    %v1385 = vadd.f32 %v1375, %v1383
    %v1386 = vtanh.pop %v1385
    %1388 = vrot.lane.b32.xlu0 %v1386, 32
    %v1389 = vpop.permute.xlu0 %1388
    %v1391 = vmul.f32 %v1373, %v1389
    %1393 = vrot.lane.b32.xlu0 %v1295, 64
    %v1394 = vpop.permute.xlu0 %1393
    %v1395 = vsel %vm187, %v1394, 0
    %1397 = vmatprep.subr.mxu0 0.0
    %1398 = vmatpush1.msra.mxu0 %v177
    %1399 = vmatprep.subr.mxu0 0.0
    %1400 = vmatpush1.msra.mxu0 %v298
    %1401 = vmatprep.subr.mxu0 0.0
    %1402 = vmatpush1.msra.mxu0 0.0
    %1403 = vmatprep.subr.mxu0 0.0
    %1404 = vmatpush1.msra.mxu0 0.0
    %1405 = vmatprep.subr.mxu0 0.0
    %1406 = vmatpush1.msra.mxu0 0.0
    %1407 = vmatprep.subr.mxu0 0.0
    %1408 = vmatpush1.msra.mxu0 0.0
    %1409 = vmatprep.subr.mxu0 0.0
    %1410 = vmatpush1.msra.mxu0 0.0
    %1411 = vmatprep.subr.mxu0 0.0
    %1412 = vmatpush1.msra.mxu0 0.0
    %1413 = vmatprep.subr.mxu0 0.0
    %1414 = vmatpush1.msra.mxu0 0.0
    %1415 = vmatprep.subr.mxu0 0.0
    %1416 = vmatpush1.msra.mxu0 0.0
    %1417 = vmatprep.subr.mxu0 0.0
    %1418 = vmatpush1.msra.mxu0 0.0
    %1419 = vmatprep.subr.mxu0 0.0
    %1420 = vmatpush1.msra.mxu0 0.0
    %1421 = vmatprep.subr.mxu0 0.0
    %1422 = vmatpush1.msra.mxu0 0.0
    %1423 = vmatprep.subr.mxu0 0.0
    %1424 = vmatpush1.msra.mxu0 0.0
    %1425 = vmatprep.subr.mxu0 0.0
    %1426 = vmatpush1.msra.mxu0 0.0
    %1427 = vmatprep.subr.mxu0 0.0
    %1428 = vmatpush1.msra.mxu0 0.0
    %1429 = vmatprep.subr.mxu0 0.0
    %1430 = vmatpush1.msra.mxu0 0.0
    %1431 = vmatprep.subr.mxu0 0.0
    %1432 = vmatpush1.msra.mxu0 0.0
    %1433 = vmatprep.subr.mxu0 0.0
    %1434 = vmatpush1.msra.mxu0 0.0
    %1435 = vmatprep.subr.mxu0 0.0
    %1436 = vmatpush1.msra.mxu0 0.0
    %1437 = vmatprep.subr.mxu0 0.0
    %1438 = vmatpush1.msra.mxu0 0.0
    %1439 = vmatprep.subr.mxu0 0.0
    %1440 = vmatpush1.msra.mxu0 0.0
    %1441 = vmatprep.subr.mxu0 0.0
    %1442 = vmatpush1.msra.mxu0 0.0
    %1443 = vmatprep.subr.mxu0 0.0
    %1444 = vmatpush1.msra.mxu0 0.0
    %1445 = vmatprep.subr.mxu0 0.0
    %1446 = vmatpush1.msra.mxu0 0.0
    %1447 = vmatprep.subr.mxu0 0.0
    %1448 = vmatpush1.msra.mxu0 0.0
    %1449 = vmatprep.subr.mxu0 0.0
    %1450 = vmatpush1.msra.mxu0 0.0
    %1451 = vmatprep.subr.mxu0 0.0
    %1452 = vmatpush1.msra.mxu0 0.0
    %1453 = vmatprep.subr.mxu0 0.0
    %1454 = vmatpush1.msra.mxu0 0.0
    %1455 = vmatprep.subr.mxu0 0.0
    %1456 = vmatpush1.msra.mxu0 0.0
    %1457 = vmatprep.subr.mxu0 0.0
    %1458 = vmatpush1.msra.mxu0 0.0
    %1459 = vmatprep.subr.mxu0 0.0
    %1460 = vmatpush1.msra.mxu0 0.0
    %1461 = vmatprep.mubr.f32.mxu0 0.0
    %1462 = vmatmul.mubr.f32.gmra.mrb[0].mxu0 %v1395
    %v1463 = vpop.f32.mrb[0].mxu0
    %v1464 = vadd.f32 0.0, %v1463
    %v1465 = vpop.f32.mrb[0].mxu0
    %1466 = vdwg.mxu0
    %1468 = vrot.lane.b32.xlu0 %v1391, 64
    %v1469 = vpop.permute.xlu0 %1468
    %v1470 = vsel %vm187, %v1469, 0
    %1472 = vmatprep.subr.mxu0 0.0
    %1473 = vmatpush1.msra.mxu0 %v175
    %1474 = vmatprep.subr.mxu0 0.0
    %1475 = vmatpush1.msra.mxu0 %v376
    %1476 = vmatprep.subr.mxu0 0.0
    %1477 = vmatpush1.msra.mxu0 0.0
    %1478 = vmatprep.subr.mxu0 0.0
    %1479 = vmatpush1.msra.mxu0 0.0
    %1480 = vmatprep.subr.mxu0 0.0
    %1481 = vmatpush1.msra.mxu0 0.0
    %1482 = vmatprep.subr.mxu0 0.0
    %1483 = vmatpush1.msra.mxu0 0.0
    %1484 = vmatprep.subr.mxu0 0.0
    %1485 = vmatpush1.msra.mxu0 0.0
    %1486 = vmatprep.subr.mxu0 0.0
    %1487 = vmatpush1.msra.mxu0 0.0
    %1488 = vmatprep.subr.mxu0 0.0
    %1489 = vmatpush1.msra.mxu0 0.0
    %1490 = vmatprep.subr.mxu0 0.0
    %1491 = vmatpush1.msra.mxu0 0.0
    %1492 = vmatprep.subr.mxu0 0.0
    %1493 = vmatpush1.msra.mxu0 0.0
    %1494 = vmatprep.subr.mxu0 0.0
    %1495 = vmatpush1.msra.mxu0 0.0
    %1496 = vmatprep.subr.mxu0 0.0
    %1497 = vmatpush1.msra.mxu0 0.0
    %1498 = vmatprep.subr.mxu0 0.0
    %1499 = vmatpush1.msra.mxu0 0.0
    %1500 = vmatprep.subr.mxu0 0.0
    %1501 = vmatpush1.msra.mxu0 0.0
    %1502 = vmatprep.subr.mxu0 0.0
    %1503 = vmatpush1.msra.mxu0 0.0
    %1504 = vmatprep.subr.mxu0 0.0
    %1505 = vmatpush1.msra.mxu0 0.0
    %1506 = vmatprep.subr.mxu0 0.0
    %1507 = vmatpush1.msra.mxu0 0.0
    %1508 = vmatprep.subr.mxu0 0.0
    %1509 = vmatpush1.msra.mxu0 0.0
    %1510 = vmatprep.subr.mxu0 0.0
    %1511 = vmatpush1.msra.mxu0 0.0
    %1512 = vmatprep.subr.mxu0 0.0
    %1513 = vmatpush1.msra.mxu0 0.0
    %1514 = vmatprep.subr.mxu0 0.0
    %1515 = vmatpush1.msra.mxu0 0.0
    %1516 = vmatprep.subr.mxu0 0.0
    %1517 = vmatpush1.msra.mxu0 0.0
    %1518 = vmatprep.subr.mxu0 0.0
    %1519 = vmatpush1.msra.mxu0 0.0
    %1520 = vmatprep.subr.mxu0 0.0
    %1521 = vmatpush1.msra.mxu0 0.0
    %1522 = vmatprep.subr.mxu0 0.0
    %1523 = vmatpush1.msra.mxu0 0.0
    %1524 = vmatprep.subr.mxu0 0.0
    %1525 = vmatpush1.msra.mxu0 0.0
    %1526 = vmatprep.subr.mxu0 0.0
    %1527 = vmatpush1.msra.mxu0 0.0
    %1528 = vmatprep.subr.mxu0 0.0
    %1529 = vmatpush1.msra.mxu0 0.0
    %1530 = vmatprep.subr.mxu0 0.0
    %1531 = vmatpush1.msra.mxu0 0.0
    %1532 = vmatprep.subr.mxu0 0.0
    %1533 = vmatpush1.msra.mxu0 0.0
    %1534 = vmatprep.subr.mxu0 0.0
    %1535 = vmatpush1.msra.mxu0 0.0
    %1536 = vmatprep.mubr.f32.mxu0 0.0
    %1537 = vmatmul.mubr.f32.gmra.mrb[0].mxu0 %v1470
    %v1538 = vpop.f32.mrb[0].mxu0
    %v1539 = vadd.f32 %v1464, %v1538
    %v1540 = vpop.f32.mrb[0].mxu0
    %1541 = vdwg.mxu0
    %v1542 = vadd.f32 %v1539, %v452
    %v1543 = vxor.u32 %v1542, 2147483648
    %v1544 = vmul.f32 %v1543, 1.442695
    %v1545 = vpow.pop %v1544
    %v1546 = vadd.f32 %v1545, 1.0
    %v1547 = vrcp.pop %v1546
    %v1548 = vmul.f32 1.0, %v1547
    %v1549 = vtanh.pop %v1542
    %v1550 = vmul.f32 %v1548, %v1289
    %1552 = vrot.lane.b32.xlu0 %v1549, 32
    %v1553 = vpop.permute.xlu0 %1552
    %v1555 = vmul.f32 %v1548, %v1553
    %1557 = vrot.lane.b32.xlu0 %v1555, 32
    %v1558 = vpop.permute.xlu0 %1557
    %v1560 = vadd.f32 %v1550, %v1558
    %v1561 = vtanh.pop %v1560
    %1563 = vrot.lane.b32.xlu0 %v1561, 32
    %v1564 = vpop.permute.xlu0 %1563
    %v1566 = vmul.f32 %v1548, %v1564
    %v1567 = vld [vmem:[#allocation2 + $0x14] sm:$0xf]
    %1568 = vmatprep.subr.mxu0 0.0
    %1569 = vmatpush1.msra.mxu0 %v173
    %1570 = vmatprep.subr.mxu0 0.0
    %1571 = vmatpush1.msra.mxu0 %v193
    %1572 = vmatprep.subr.mxu0 0.0
    %1573 = vmatpush1.msra.mxu0 0.0
    %1574 = vmatprep.subr.mxu0 0.0
    %1575 = vmatpush1.msra.mxu0 0.0
    %1576 = vmatprep.subr.mxu0 0.0
    %1577 = vmatpush1.msra.mxu0 0.0
    %1578 = vmatprep.subr.mxu0 0.0
    %1579 = vmatpush1.msra.mxu0 0.0
    %1580 = vmatprep.subr.mxu0 0.0
    %1581 = vmatpush1.msra.mxu0 0.0
    %1582 = vmatprep.subr.mxu0 0.0
    %1583 = vmatpush1.msra.mxu0 0.0
    %1584 = vmatprep.subr.mxu0 0.0
    %1585 = vmatpush1.msra.mxu0 0.0
    %1586 = vmatprep.subr.mxu0 0.0
    %1587 = vmatpush1.msra.mxu0 0.0
    %1588 = vmatprep.subr.mxu0 0.0
    %1589 = vmatpush1.msra.mxu0 0.0
    %1590 = vmatprep.subr.mxu0 0.0
    %1591 = vmatpush1.msra.mxu0 0.0
    %1592 = vmatprep.subr.mxu0 0.0
    %1593 = vmatpush1.msra.mxu0 0.0
    %1594 = vmatprep.subr.mxu0 0.0
    %1595 = vmatpush1.msra.mxu0 0.0
    %1596 = vmatprep.subr.mxu0 0.0
    %1597 = vmatpush1.msra.mxu0 0.0
    %1598 = vmatprep.subr.mxu0 0.0
    %1599 = vmatpush1.msra.mxu0 0.0
    %1600 = vmatprep.subr.mxu0 0.0
    %1601 = vmatpush1.msra.mxu0 0.0
    %1602 = vmatprep.subr.mxu0 0.0
    %1603 = vmatpush1.msra.mxu0 0.0
    %1604 = vmatprep.subr.mxu0 0.0
    %1605 = vmatpush1.msra.mxu0 0.0
    %1606 = vmatprep.subr.mxu0 0.0
    %1607 = vmatpush1.msra.mxu0 0.0
    %1608 = vmatprep.subr.mxu0 0.0
    %1609 = vmatpush1.msra.mxu0 0.0
    %1610 = vmatprep.subr.mxu0 0.0
    %1611 = vmatpush1.msra.mxu0 0.0
    %1612 = vmatprep.subr.mxu0 0.0
    %1613 = vmatpush1.msra.mxu0 0.0
    %1614 = vmatprep.subr.mxu0 0.0
    %1615 = vmatpush1.msra.mxu0 0.0
    %1616 = vmatprep.subr.mxu0 0.0
    %1617 = vmatpush1.msra.mxu0 0.0
    %1618 = vmatprep.subr.mxu0 0.0
    %1619 = vmatpush1.msra.mxu0 0.0
    %1620 = vmatprep.subr.mxu0 0.0
    %1621 = vmatpush1.msra.mxu0 0.0
    %1622 = vmatprep.subr.mxu0 0.0
    %1623 = vmatpush1.msra.mxu0 0.0
    %1624 = vmatprep.subr.mxu0 0.0
    %1625 = vmatpush1.msra.mxu0 0.0
    %1626 = vmatprep.subr.mxu0 0.0
    %1627 = vmatpush1.msra.mxu0 0.0
    %1628 = vmatprep.subr.mxu0 0.0
    %1629 = vmatpush1.msra.mxu0 0.0
    %1630 = vmatprep.subr.mxu0 0.0
    %1631 = vmatpush1.msra.mxu0 0.0
    %1632 = vmatprep.mubr.f32.mxu0 0.0
    %1633 = vmatmul.mubr.f32.gmra.mrb[0].mxu0 %v1470
    %v1634 = vpop.f32.mrb[0].mxu0
    %v1635 = vadd.f32 0.0, %v1634
    %v1636 = vpop.f32.mrb[0].mxu0
    %1637 = vdwg.mxu0
    %v1638 = vadd.f32 %v1567, %v1635
    %v1639 = vxor.u32 %v1638, 2147483648
    %v1640 = vmul.f32 %v1639, 1.442695
    %v1641 = vpow.pop %v1640
    %v1642 = vadd.f32 %v1641, 1.0
    %v1643 = vrcp.pop %v1642
    %v1644 = vmul.f32 1.0, %v1643
    %v1645 = vtanh.pop %v1638
    %v1646 = vmul.f32 %v1644, %v1385
    %1648 = vrot.lane.b32.xlu0 %v1645, 32
    %v1649 = vpop.permute.xlu0 %1648
    %v1651 = vmul.f32 %v1644, %v1649
    %1653 = vrot.lane.b32.xlu0 %v1651, 32
    %v1654 = vpop.permute.xlu0 %1653
    %v1656 = vadd.f32 %v1646, %v1654
    %v1657 = vtanh.pop %v1656
    %1659 = vrot.lane.b32.xlu0 %v1657, 32
    %v1660 = vpop.permute.xlu0 %1659
    %v1662 = vmul.f32 %v1644, %v1660
    %1664 = vrot.lane.b32.xlu0 %v1566, 64
    %v1665 = vpop.permute.xlu0 %1664
    %v1666 = vsel %vm187, %v1665, 0
    %1668 = vmatprep.subr.mxu0 0.0
    %1669 = vmatpush1.msra.mxu0 %v177
    %1670 = vmatprep.subr.mxu0 0.0
    %1671 = vmatpush1.msra.mxu0 %v298
    %1672 = vmatprep.subr.mxu0 0.0
    %1673 = vmatpush1.msra.mxu0 0.0
    %1674 = vmatprep.subr.mxu0 0.0
    %1675 = vmatpush1.msra.mxu0 0.0
    %1676 = vmatprep.subr.mxu0 0.0
    %1677 = vmatpush1.msra.mxu0 0.0
    %1678 = vmatprep.subr.mxu0 0.0
    %1679 = vmatpush1.msra.mxu0 0.0
    %1680 = vmatprep.subr.mxu0 0.0
    %1681 = vmatpush1.msra.mxu0 0.0
    %1682 = vmatprep.subr.mxu0 0.0
    %1683 = vmatpush1.msra.mxu0 0.0
    %1684 = vmatprep.subr.mxu0 0.0
    %1685 = vmatpush1.msra.mxu0 0.0
    %1686 = vmatprep.subr.mxu0 0.0
    %1687 = vmatpush1.msra.mxu0 0.0
    %1688 = vmatprep.subr.mxu0 0.0
    %1689 = vmatpush1.msra.mxu0 0.0
    %1690 = vmatprep.subr.mxu0 0.0
    %1691 = vmatpush1.msra.mxu0 0.0
    %1692 = vmatprep.subr.mxu0 0.0
    %1693 = vmatpush1.msra.mxu0 0.0
    %1694 = vmatprep.subr.mxu0 0.0
    %1695 = vmatpush1.msra.mxu0 0.0
    %1696 = vmatprep.subr.mxu0 0.0
    %1697 = vmatpush1.msra.mxu0 0.0
    %1698 = vmatprep.subr.mxu0 0.0
    %1699 = vmatpush1.msra.mxu0 0.0
    %1700 = vmatprep.subr.mxu0 0.0
    %1701 = vmatpush1.msra.mxu0 0.0
    %1702 = vmatprep.subr.mxu0 0.0
    %1703 = vmatpush1.msra.mxu0 0.0
    %1704 = vmatprep.subr.mxu0 0.0
    %1705 = vmatpush1.msra.mxu0 0.0
    %1706 = vmatprep.subr.mxu0 0.0
    %1707 = vmatpush1.msra.mxu0 0.0
    %1708 = vmatprep.subr.mxu0 0.0
    %1709 = vmatpush1.msra.mxu0 0.0
    %1710 = vmatprep.subr.mxu0 0.0
    %1711 = vmatpush1.msra.mxu0 0.0
    %1712 = vmatprep.subr.mxu0 0.0
    %1713 = vmatpush1.msra.mxu0 0.0
    %1714 = vmatprep.subr.mxu0 0.0
    %1715 = vmatpush1.msra.mxu0 0.0
    %1716 = vmatprep.subr.mxu0 0.0
    %1717 = vmatpush1.msra.mxu0 0.0
    %1718 = vmatprep.subr.mxu0 0.0
    %1719 = vmatpush1.msra.mxu0 0.0
    %1720 = vmatprep.subr.mxu0 0.0
    %1721 = vmatpush1.msra.mxu0 0.0
    %1722 = vmatprep.subr.mxu0 0.0
    %1723 = vmatpush1.msra.mxu0 0.0
    %1724 = vmatprep.subr.mxu0 0.0
    %1725 = vmatpush1.msra.mxu0 0.0
    %1726 = vmatprep.subr.mxu0 0.0
    %1727 = vmatpush1.msra.mxu0 0.0
    %1728 = vmatprep.subr.mxu0 0.0
    %1729 = vmatpush1.msra.mxu0 0.0
    %1730 = vmatprep.subr.mxu0 0.0
    %1731 = vmatpush1.msra.mxu0 0.0
    %1732 = vmatprep.mubr.f32.mxu0 0.0
    %1733 = vmatmul.mubr.f32.gmra.mrb[0].mxu0 %v1666
    %v1734 = vpop.f32.mrb[0].mxu0
    %v1735 = vadd.f32 0.0, %v1734
    %v1736 = vpop.f32.mrb[0].mxu0
    %1737 = vdwg.mxu0
    %1739 = vrot.lane.b32.xlu0 %v1662, 64
    %v1740 = vpop.permute.xlu0 %1739
    %v1741 = vsel %vm187, %v1740, 0
    %1743 = vmatprep.subr.mxu0 0.0
    %1744 = vmatpush1.msra.mxu0 %v175
    %1745 = vmatprep.subr.mxu0 0.0
    %1746 = vmatpush1.msra.mxu0 %v376
    %1747 = vmatprep.subr.mxu0 0.0
    %1748 = vmatpush1.msra.mxu0 0.0
    %1749 = vmatprep.subr.mxu0 0.0
    %1750 = vmatpush1.msra.mxu0 0.0
    %1751 = vmatprep.subr.mxu0 0.0
    %1752 = vmatpush1.msra.mxu0 0.0
    %1753 = vmatprep.subr.mxu0 0.0
    %1754 = vmatpush1.msra.mxu0 0.0
    %1755 = vmatprep.subr.mxu0 0.0
    %1756 = vmatpush1.msra.mxu0 0.0
    %1757 = vmatprep.subr.mxu0 0.0
    %1758 = vmatpush1.msra.mxu0 0.0
    %1759 = vmatprep.subr.mxu0 0.0
    %1760 = vmatpush1.msra.mxu0 0.0
    %1761 = vmatprep.subr.mxu0 0.0
    %1762 = vmatpush1.msra.mxu0 0.0
    %1763 = vmatprep.subr.mxu0 0.0
    %1764 = vmatpush1.msra.mxu0 0.0
    %1765 = vmatprep.subr.mxu0 0.0
    %1766 = vmatpush1.msra.mxu0 0.0
    %1767 = vmatprep.subr.mxu0 0.0
    %1768 = vmatpush1.msra.mxu0 0.0
    %1769 = vmatprep.subr.mxu0 0.0
    %1770 = vmatpush1.msra.mxu0 0.0
    %1771 = vmatprep.subr.mxu0 0.0
    %1772 = vmatpush1.msra.mxu0 0.0
    %1773 = vmatprep.subr.mxu0 0.0
    %1774 = vmatpush1.msra.mxu0 0.0
    %1775 = vmatprep.subr.mxu0 0.0
    %1776 = vmatpush1.msra.mxu0 0.0
    %1777 = vmatprep.subr.mxu0 0.0
    %1778 = vmatpush1.msra.mxu0 0.0
    %1779 = vmatprep.subr.mxu0 0.0
    %1780 = vmatpush1.msra.mxu0 0.0
    %1781 = vmatprep.subr.mxu0 0.0
    %1782 = vmatpush1.msra.mxu0 0.0
    %1783 = vmatprep.subr.mxu0 0.0
    %1784 = vmatpush1.msra.mxu0 0.0
    %1785 = vmatprep.subr.mxu0 0.0
    %1786 = vmatpush1.msra.mxu0 0.0
    %1787 = vmatprep.subr.mxu0 0.0
    %1788 = vmatpush1.msra.mxu0 0.0
    %1789 = vmatprep.subr.mxu0 0.0
    %1790 = vmatpush1.msra.mxu0 0.0
    %1791 = vmatprep.subr.mxu0 0.0
    %1792 = vmatpush1.msra.mxu0 0.0
    %1793 = vmatprep.subr.mxu0 0.0
    %1794 = vmatpush1.msra.mxu0 0.0
    %1795 = vmatprep.subr.mxu0 0.0
    %1796 = vmatpush1.msra.mxu0 0.0
    %1797 = vmatprep.subr.mxu0 0.0
    %1798 = vmatpush1.msra.mxu0 0.0
    %1799 = vmatprep.subr.mxu0 0.0
    %1800 = vmatpush1.msra.mxu0 0.0
    %1801 = vmatprep.subr.mxu0 0.0
    %1802 = vmatpush1.msra.mxu0 0.0
    %1803 = vmatprep.subr.mxu0 0.0
    %1804 = vmatpush1.msra.mxu0 0.0
    %1805 = vmatprep.subr.mxu0 0.0
    %1806 = vmatpush1.msra.mxu0 0.0
    %1807 = vmatprep.mubr.f32.mxu0 0.0
    %1808 = vmatmul.mubr.f32.gmra.mrb[0].mxu0 %v1741
    %v1809 = vpop.f32.mrb[0].mxu0
    %v1810 = vadd.f32 %v1735, %v1809
    %v1811 = vpop.f32.mrb[0].mxu0
    %1812 = vdwg.mxu0
    %v1813 = vadd.f32 %v1810, %v452
    %v1814 = vxor.u32 %v1813, 2147483648
    %v1815 = vmul.f32 %v1814, 1.442695
    %v1816 = vpow.pop %v1815
    %v1817 = vadd.f32 %v1816, 1.0
    %v1818 = vrcp.pop %v1817
    %v1819 = vmul.f32 1.0, %v1818
    %v1820 = vtanh.pop %v1813
    %v1821 = vmul.f32 %v1819, %v1560
    %1823 = vrot.lane.b32.xlu0 %v1820, 32
    %v1824 = vpop.permute.xlu0 %1823
    %v1826 = vmul.f32 %v1819, %v1824
    %1828 = vrot.lane.b32.xlu0 %v1826, 32
    %v1829 = vpop.permute.xlu0 %1828
    %v1831 = vadd.f32 %v1821, %v1829
    %v1832 = vtanh.pop %v1831
    %1834 = vrot.lane.b32.xlu0 %v1832, 32
    %v1835 = vpop.permute.xlu0 %1834
    %v1837 = vmul.f32 %v1819, %v1835
    %v1838 = vld [vmem:[#allocation2 + $0x18] sm:$0xf]
    %1839 = vmatprep.subr.mxu0 0.0
    %1840 = vmatpush1.msra.mxu0 %v173
    %1841 = vmatprep.subr.mxu0 0.0
    %1842 = vmatpush1.msra.mxu0 %v193
    %1843 = vmatprep.subr.mxu0 0.0
    %1844 = vmatpush1.msra.mxu0 0.0
    %1845 = vmatprep.subr.mxu0 0.0
    %1846 = vmatpush1.msra.mxu0 0.0
    %1847 = vmatprep.subr.mxu0 0.0
    %1848 = vmatpush1.msra.mxu0 0.0
    %1849 = vmatprep.subr.mxu0 0.0
    %1850 = vmatpush1.msra.mxu0 0.0
    %1851 = vmatprep.subr.mxu0 0.0
    %1852 = vmatpush1.msra.mxu0 0.0
    %1853 = vmatprep.subr.mxu0 0.0
    %1854 = vmatpush1.msra.mxu0 0.0
    %1855 = vmatprep.subr.mxu0 0.0
    %1856 = vmatpush1.msra.mxu0 0.0
    %1857 = vmatprep.subr.mxu0 0.0
    %1858 = vmatpush1.msra.mxu0 0.0
    %1859 = vmatprep.subr.mxu0 0.0
    %1860 = vmatpush1.msra.mxu0 0.0
    %1861 = vmatprep.subr.mxu0 0.0
    %1862 = vmatpush1.msra.mxu0 0.0
    %1863 = vmatprep.subr.mxu0 0.0
    %1864 = vmatpush1.msra.mxu0 0.0
    %1865 = vmatprep.subr.mxu0 0.0
    %1866 = vmatpush1.msra.mxu0 0.0
    %1867 = vmatprep.subr.mxu0 0.0
    %1868 = vmatpush1.msra.mxu0 0.0
    %1869 = vmatprep.subr.mxu0 0.0
    %1870 = vmatpush1.msra.mxu0 0.0
    %1871 = vmatprep.subr.mxu0 0.0
    %1872 = vmatpush1.msra.mxu0 0.0
    %1873 = vmatprep.subr.mxu0 0.0
    %1874 = vmatpush1.msra.mxu0 0.0
    %1875 = vmatprep.subr.mxu0 0.0
    %1876 = vmatpush1.msra.mxu0 0.0
    %1877 = vmatprep.subr.mxu0 0.0
    %1878 = vmatpush1.msra.mxu0 0.0
    %1879 = vmatprep.subr.mxu0 0.0
    %1880 = vmatpush1.msra.mxu0 0.0
    %1881 = vmatprep.subr.mxu0 0.0
    %1882 = vmatpush1.msra.mxu0 0.0
    %1883 = vmatprep.subr.mxu0 0.0
    %1884 = vmatpush1.msra.mxu0 0.0
    %1885 = vmatprep.subr.mxu0 0.0
    %1886 = vmatpush1.msra.mxu0 0.0
    %1887 = vmatprep.subr.mxu0 0.0
    %1888 = vmatpush1.msra.mxu0 0.0
    %1889 = vmatprep.subr.mxu0 0.0
    %1890 = vmatpush1.msra.mxu0 0.0
    %1891 = vmatprep.subr.mxu0 0.0
    %1892 = vmatpush1.msra.mxu0 0.0
    %1893 = vmatprep.subr.mxu0 0.0
    %1894 = vmatpush1.msra.mxu0 0.0
    %1895 = vmatprep.subr.mxu0 0.0
    %1896 = vmatpush1.msra.mxu0 0.0
    %1897 = vmatprep.subr.mxu0 0.0
    %1898 = vmatpush1.msra.mxu0 0.0
    %1899 = vmatprep.subr.mxu0 0.0
    %1900 = vmatpush1.msra.mxu0 0.0
    %1901 = vmatprep.subr.mxu0 0.0
    %1902 = vmatpush1.msra.mxu0 0.0
    %1903 = vmatprep.mubr.f32.mxu0 0.0
    %1904 = vmatmul.mubr.f32.gmra.mrb[0].mxu0 %v1741
    %v1905 = vpop.f32.mrb[0].mxu0
    %v1906 = vadd.f32 0.0, %v1905
    %v1907 = vpop.f32.mrb[0].mxu0
    %1908 = vdwg.mxu0
    %v1909 = vadd.f32 %v1838, %v1906
    %v1910 = vxor.u32 %v1909, 2147483648
    %v1911 = vmul.f32 %v1910, 1.442695
    %v1912 = vpow.pop %v1911
    %v1913 = vadd.f32 %v1912, 1.0
    %v1914 = vrcp.pop %v1913
    %v1915 = vmul.f32 1.0, %v1914
    %v1916 = vtanh.pop %v1909
    %v1917 = vmul.f32 %v1915, %v1656
    %1919 = vrot.lane.b32.xlu0 %v1916, 32
    %v1920 = vpop.permute.xlu0 %1919
    %v1922 = vmul.f32 %v1915, %v1920
    %1924 = vrot.lane.b32.xlu0 %v1922, 32
    %v1925 = vpop.permute.xlu0 %1924
    %v1927 = vadd.f32 %v1917, %v1925
    %v1928 = vtanh.pop %v1927
    %1930 = vrot.lane.b32.xlu0 %v1928, 32
    %v1931 = vpop.permute.xlu0 %1930
    %v1933 = vmul.f32 %v1915, %v1931
    %1935 = vrot.lane.b32.xlu0 %v1837, 64
    %v1936 = vpop.permute.xlu0 %1935
    %v1937 = vsel %vm187, %v1936, 0
    %1939 = vmatprep.subr.mxu0 0.0
    %1940 = vmatpush1.msra.mxu0 %v177
    %1941 = vmatprep.subr.mxu0 0.0
    %1942 = vmatpush1.msra.mxu0 %v298
    %1943 = vmatprep.subr.mxu0 0.0
    %1944 = vmatpush1.msra.mxu0 0.0
    %1945 = vmatprep.subr.mxu0 0.0
    %1946 = vmatpush1.msra.mxu0 0.0
    %1947 = vmatprep.subr.mxu0 0.0
    %1948 = vmatpush1.msra.mxu0 0.0
    %1949 = vmatprep.subr.mxu0 0.0
    %1950 = vmatpush1.msra.mxu0 0.0
    %1951 = vmatprep.subr.mxu0 0.0
    %1952 = vmatpush1.msra.mxu0 0.0
    %1953 = vmatprep.subr.mxu0 0.0
    %1954 = vmatpush1.msra.mxu0 0.0
    %1955 = vmatprep.subr.mxu0 0.0
    %1956 = vmatpush1.msra.mxu0 0.0
    %1957 = vmatprep.subr.mxu0 0.0
    %1958 = vmatpush1.msra.mxu0 0.0
    %1959 = vmatprep.subr.mxu0 0.0
    %1960 = vmatpush1.msra.mxu0 0.0
    %1961 = vmatprep.subr.mxu0 0.0
    %1962 = vmatpush1.msra.mxu0 0.0
    %1963 = vmatprep.subr.mxu0 0.0
    %1964 = vmatpush1.msra.mxu0 0.0
    %1965 = vmatprep.subr.mxu0 0.0
    %1966 = vmatpush1.msra.mxu0 0.0
    %1967 = vmatprep.subr.mxu0 0.0
    %1968 = vmatpush1.msra.mxu0 0.0
    %1969 = vmatprep.subr.mxu0 0.0
    %1970 = vmatpush1.msra.mxu0 0.0
    %1971 = vmatprep.subr.mxu0 0.0
    %1972 = vmatpush1.msra.mxu0 0.0
    %1973 = vmatprep.subr.mxu0 0.0
    %1974 = vmatpush1.msra.mxu0 0.0
    %1975 = vmatprep.subr.mxu0 0.0
    %1976 = vmatpush1.msra.mxu0 0.0
    %1977 = vmatprep.subr.mxu0 0.0
    %1978 = vmatpush1.msra.mxu0 0.0
    %1979 = vmatprep.subr.mxu0 0.0
    %1980 = vmatpush1.msra.mxu0 0.0
    %1981 = vmatprep.subr.mxu0 0.0
    %1982 = vmatpush1.msra.mxu0 0.0
    %1983 = vmatprep.subr.mxu0 0.0
    %1984 = vmatpush1.msra.mxu0 0.0
    %1985 = vmatprep.subr.mxu0 0.0
    %1986 = vmatpush1.msra.mxu0 0.0
    %1987 = vmatprep.subr.mxu0 0.0
    %1988 = vmatpush1.msra.mxu0 0.0
    %1989 = vmatprep.subr.mxu0 0.0
    %1990 = vmatpush1.msra.mxu0 0.0
    %1991 = vmatprep.subr.mxu0 0.0
    %1992 = vmatpush1.msra.mxu0 0.0
    %1993 = vmatprep.subr.mxu0 0.0
    %1994 = vmatpush1.msra.mxu0 0.0
    %1995 = vmatprep.subr.mxu0 0.0
    %1996 = vmatpush1.msra.mxu0 0.0
    %1997 = vmatprep.subr.mxu0 0.0
    %1998 = vmatpush1.msra.mxu0 0.0
    %1999 = vmatprep.subr.mxu0 0.0
    %2000 = vmatpush1.msra.mxu0 0.0
    %2001 = vmatprep.subr.mxu0 0.0
    %2002 = vmatpush1.msra.mxu0 0.0
    %2003 = vmatprep.mubr.f32.mxu0 0.0
    %2004 = vmatmul.mubr.f32.gmra.mrb[0].mxu0 %v1937
    %v2005 = vpop.f32.mrb[0].mxu0
    %v2006 = vadd.f32 0.0, %v2005
    %v2007 = vpop.f32.mrb[0].mxu0
    %2008 = vdwg.mxu0
    %2010 = vrot.lane.b32.xlu0 %v1933, 64
    %v2011 = vpop.permute.xlu0 %2010
    %v2012 = vsel %vm187, %v2011, 0
    %2014 = vmatprep.subr.mxu0 0.0
    %2015 = vmatpush1.msra.mxu0 %v175
    %2016 = vmatprep.subr.mxu0 0.0
    %2017 = vmatpush1.msra.mxu0 %v376
    %2018 = vmatprep.subr.mxu0 0.0
    %2019 = vmatpush1.msra.mxu0 0.0
    %2020 = vmatprep.subr.mxu0 0.0
    %2021 = vmatpush1.msra.mxu0 0.0
    %2022 = vmatprep.subr.mxu0 0.0
    %2023 = vmatpush1.msra.mxu0 0.0
    %2024 = vmatprep.subr.mxu0 0.0
    %2025 = vmatpush1.msra.mxu0 0.0
    %2026 = vmatprep.subr.mxu0 0.0
    %2027 = vmatpush1.msra.mxu0 0.0
    %2028 = vmatprep.subr.mxu0 0.0
    %2029 = vmatpush1.msra.mxu0 0.0
    %2030 = vmatprep.subr.mxu0 0.0
    %2031 = vmatpush1.msra.mxu0 0.0
    %2032 = vmatprep.subr.mxu0 0.0
    %2033 = vmatpush1.msra.mxu0 0.0
    %2034 = vmatprep.subr.mxu0 0.0
    %2035 = vmatpush1.msra.mxu0 0.0
    %2036 = vmatprep.subr.mxu0 0.0
    %2037 = vmatpush1.msra.mxu0 0.0
    %2038 = vmatprep.subr.mxu0 0.0
    %2039 = vmatpush1.msra.mxu0 0.0
    %2040 = vmatprep.subr.mxu0 0.0
    %2041 = vmatpush1.msra.mxu0 0.0
    %2042 = vmatprep.subr.mxu0 0.0
    %2043 = vmatpush1.msra.mxu0 0.0
    %2044 = vmatprep.subr.mxu0 0.0
    %2045 = vmatpush1.msra.mxu0 0.0
    %2046 = vmatprep.subr.mxu0 0.0
    %2047 = vmatpush1.msra.mxu0 0.0
    %2048 = vmatprep.subr.mxu0 0.0
    %2049 = vmatpush1.msra.mxu0 0.0
    %2050 = vmatprep.subr.mxu0 0.0
    %2051 = vmatpush1.msra.mxu0 0.0
    %2052 = vmatprep.subr.mxu0 0.0
    %2053 = vmatpush1.msra.mxu0 0.0
    %2054 = vmatprep.subr.mxu0 0.0
    %2055 = vmatpush1.msra.mxu0 0.0
    %2056 = vmatprep.subr.mxu0 0.0
    %2057 = vmatpush1.msra.mxu0 0.0
    %2058 = vmatprep.subr.mxu0 0.0
    %2059 = vmatpush1.msra.mxu0 0.0
    %2060 = vmatprep.subr.mxu0 0.0
    %2061 = vmatpush1.msra.mxu0 0.0
    %2062 = vmatprep.subr.mxu0 0.0
    %2063 = vmatpush1.msra.mxu0 0.0
    %2064 = vmatprep.subr.mxu0 0.0
    %2065 = vmatpush1.msra.mxu0 0.0
    %2066 = vmatprep.subr.mxu0 0.0
    %2067 = vmatpush1.msra.mxu0 0.0
    %2068 = vmatprep.subr.mxu0 0.0
    %2069 = vmatpush1.msra.mxu0 0.0
    %2070 = vmatprep.subr.mxu0 0.0
    %2071 = vmatpush1.msra.mxu0 0.0
    %2072 = vmatprep.subr.mxu0 0.0
    %2073 = vmatpush1.msra.mxu0 0.0
    %2074 = vmatprep.subr.mxu0 0.0
    %2075 = vmatpush1.msra.mxu0 0.0
    %2076 = vmatprep.subr.mxu0 0.0
    %2077 = vmatpush1.msra.mxu0 0.0
    %2078 = vmatprep.mubr.f32.mxu0 0.0
    %2079 = vmatmul.mubr.f32.gmra.mrb[0].mxu0 %v2012
    %v2080 = vpop.f32.mrb[0].mxu0
    %v2081 = vadd.f32 %v2006, %v2080
    %v2082 = vpop.f32.mrb[0].mxu0
    %2083 = vdwg.mxu0
    %v2084 = vadd.f32 %v2081, %v452
    %v2085 = vxor.u32 %v2084, 2147483648
    %v2086 = vmul.f32 %v2085, 1.442695
    %v2087 = vpow.pop %v2086
    %v2088 = vadd.f32 %v2087, 1.0
    %v2089 = vrcp.pop %v2088
    %v2090 = vmul.f32 1.0, %v2089
    %v2091 = vtanh.pop %v2084
    %v2092 = vmul.f32 %v2090, %v1831
    %2094 = vrot.lane.b32.xlu0 %v2091, 32
    %v2095 = vpop.permute.xlu0 %2094
    %v2097 = vmul.f32 %v2090, %v2095
    %2099 = vrot.lane.b32.xlu0 %v2097, 32
    %v2100 = vpop.permute.xlu0 %2099
    %v2102 = vadd.f32 %v2092, %v2100
    %v2103 = vtanh.pop %v2102
    %2105 = vrot.lane.b32.xlu0 %v2103, 32
    %v2106 = vpop.permute.xlu0 %2105
    %v2108 = vmul.f32 %v2090, %v2106
    %v2109 = vld [vmem:[#allocation2 + $0x1c] sm:$0xf]
    %2110 = vmatprep.subr.mxu0 0.0
    %2111 = vmatpush1.msra.mxu0 %v173
    %2112 = vmatprep.subr.mxu0 0.0
    %2113 = vmatpush1.msra.mxu0 %v193
    %2114 = vmatprep.subr.mxu0 0.0
    %2115 = vmatpush1.msra.mxu0 0.0
    %2116 = vmatprep.subr.mxu0 0.0
    %2117 = vmatpush1.msra.mxu0 0.0
    %2118 = vmatprep.subr.mxu0 0.0
    %2119 = vmatpush1.msra.mxu0 0.0
    %2120 = vmatprep.subr.mxu0 0.0
    %2121 = vmatpush1.msra.mxu0 0.0
    %2122 = vmatprep.subr.mxu0 0.0
    %2123 = vmatpush1.msra.mxu0 0.0
    %2124 = vmatprep.subr.mxu0 0.0
    %2125 = vmatpush1.msra.mxu0 0.0
    %2126 = vmatprep.subr.mxu0 0.0
    %2127 = vmatpush1.msra.mxu0 0.0
    %2128 = vmatprep.subr.mxu0 0.0
    %2129 = vmatpush1.msra.mxu0 0.0
    %2130 = vmatprep.subr.mxu0 0.0
    %2131 = vmatpush1.msra.mxu0 0.0
    %2132 = vmatprep.subr.mxu0 0.0
    %2133 = vmatpush1.msra.mxu0 0.0
    %2134 = vmatprep.subr.mxu0 0.0
    %2135 = vmatpush1.msra.mxu0 0.0
    %2136 = vmatprep.subr.mxu0 0.0
    %2137 = vmatpush1.msra.mxu0 0.0
    %2138 = vmatprep.subr.mxu0 0.0
    %2139 = vmatpush1.msra.mxu0 0.0
    %2140 = vmatprep.subr.mxu0 0.0
    %2141 = vmatpush1.msra.mxu0 0.0
    %2142 = vmatprep.subr.mxu0 0.0
    %2143 = vmatpush1.msra.mxu0 0.0
    %2144 = vmatprep.subr.mxu0 0.0
    %2145 = vmatpush1.msra.mxu0 0.0
    %2146 = vmatprep.subr.mxu0 0.0
    %2147 = vmatpush1.msra.mxu0 0.0
    %2148 = vmatprep.subr.mxu0 0.0
    %2149 = vmatpush1.msra.mxu0 0.0
    %2150 = vmatprep.subr.mxu0 0.0
    %2151 = vmatpush1.msra.mxu0 0.0
    %2152 = vmatprep.subr.mxu0 0.0
    %2153 = vmatpush1.msra.mxu0 0.0
    %2154 = vmatprep.subr.mxu0 0.0
    %2155 = vmatpush1.msra.mxu0 0.0
    %2156 = vmatprep.subr.mxu0 0.0
    %2157 = vmatpush1.msra.mxu0 0.0
    %2158 = vmatprep.subr.mxu0 0.0
    %2159 = vmatpush1.msra.mxu0 0.0
    %2160 = vmatprep.subr.mxu0 0.0
    %2161 = vmatpush1.msra.mxu0 0.0
    %2162 = vmatprep.subr.mxu0 0.0
    %2163 = vmatpush1.msra.mxu0 0.0
    %2164 = vmatprep.subr.mxu0 0.0
    %2165 = vmatpush1.msra.mxu0 0.0
    %2166 = vmatprep.subr.mxu0 0.0
    %2167 = vmatpush1.msra.mxu0 0.0
    %2168 = vmatprep.subr.mxu0 0.0
    %2169 = vmatpush1.msra.mxu0 0.0
    %2170 = vmatprep.subr.mxu0 0.0
    %2171 = vmatpush1.msra.mxu0 0.0
    %2172 = vmatprep.subr.mxu0 0.0
    %2173 = vmatpush1.msra.mxu0 0.0
    %2174 = vmatprep.mubr.f32.mxu0 0.0
    %2175 = vmatmul.mubr.f32.gmra.mrb[0].mxu0 %v2012
    %v2176 = vpop.f32.mrb[0].mxu0
    %v2177 = vadd.f32 0.0, %v2176
    %v2178 = vpop.f32.mrb[0].mxu0
    %2179 = vdwg.mxu0
    %v2180 = vadd.f32 %v2109, %v2177
    %v2181 = vxor.u32 %v2180, 2147483648
    %v2182 = vmul.f32 %v2181, 1.442695
    %v2183 = vpow.pop %v2182
    %v2184 = vadd.f32 %v2183, 1.0
    %v2185 = vrcp.pop %v2184
    %v2186 = vmul.f32 1.0, %v2185
    %v2187 = vtanh.pop %v2180
    %v2188 = vmul.f32 %v2186, %v1927
    %2190 = vrot.lane.b32.xlu0 %v2187, 32
    %v2191 = vpop.permute.xlu0 %2190
    %v2193 = vmul.f32 %v2186, %v2191
    %2195 = vrot.lane.b32.xlu0 %v2193, 32
    %v2196 = vpop.permute.xlu0 %2195
    %v2198 = vadd.f32 %v2188, %v2196
    %v2199 = vtanh.pop %v2198
    %2201 = vrot.lane.b32.xlu0 %v2199, 32
    %v2202 = vpop.permute.xlu0 %2201
    %v2204 = vmul.f32 %v2186, %v2202
    %2206 = vrot.lane.b32.xlu0 %v2108, 64
    %v2207 = vpop.permute.xlu0 %2206
    %v2208 = vsel %vm187, %v2207, 0
    %2210 = vmatprep.subr.mxu0 0.0
    %2211 = vmatpush1.msra.mxu0 %v177
    %2212 = vmatprep.subr.mxu0 0.0
    %2213 = vmatpush1.msra.mxu0 %v298
    %2214 = vmatprep.subr.mxu0 0.0
    %2215 = vmatpush1.msra.mxu0 0.0
    %2216 = vmatprep.subr.mxu0 0.0
    %2217 = vmatpush1.msra.mxu0 0.0
    %2218 = vmatprep.subr.mxu0 0.0
    %2219 = vmatpush1.msra.mxu0 0.0
    %2220 = vmatprep.subr.mxu0 0.0
    %2221 = vmatpush1.msra.mxu0 0.0
    %2222 = vmatprep.subr.mxu0 0.0
    %2223 = vmatpush1.msra.mxu0 0.0
    %2224 = vmatprep.subr.mxu0 0.0
    %2225 = vmatpush1.msra.mxu0 0.0
    %2226 = vmatprep.subr.mxu0 0.0
    %2227 = vmatpush1.msra.mxu0 0.0
    %2228 = vmatprep.subr.mxu0 0.0
    %2229 = vmatpush1.msra.mxu0 0.0
    %2230 = vmatprep.subr.mxu0 0.0
    %2231 = vmatpush1.msra.mxu0 0.0
    %2232 = vmatprep.subr.mxu0 0.0
    %2233 = vmatpush1.msra.mxu0 0.0
    %2234 = vmatprep.subr.mxu0 0.0
    %2235 = vmatpush1.msra.mxu0 0.0
    %2236 = vmatprep.subr.mxu0 0.0
    %2237 = vmatpush1.msra.mxu0 0.0
    %2238 = vmatprep.subr.mxu0 0.0
    %2239 = vmatpush1.msra.mxu0 0.0
    %2240 = vmatprep.subr.mxu0 0.0
    %2241 = vmatpush1.msra.mxu0 0.0
    %2242 = vmatprep.subr.mxu0 0.0
    %2243 = vmatpush1.msra.mxu0 0.0
    %2244 = vmatprep.subr.mxu0 0.0
    %2245 = vmatpush1.msra.mxu0 0.0
    %2246 = vmatprep.subr.mxu0 0.0
    %2247 = vmatpush1.msra.mxu0 0.0
    %2248 = vmatprep.subr.mxu0 0.0
    %2249 = vmatpush1.msra.mxu0 0.0
    %2250 = vmatprep.subr.mxu0 0.0
    %2251 = vmatpush1.msra.mxu0 0.0
    %2252 = vmatprep.subr.mxu0 0.0
    %2253 = vmatpush1.msra.mxu0 0.0
    %2254 = vmatprep.subr.mxu0 0.0
    %2255 = vmatpush1.msra.mxu0 0.0
    %2256 = vmatprep.subr.mxu0 0.0
    %2257 = vmatpush1.msra.mxu0 0.0
    %2258 = vmatprep.subr.mxu0 0.0
    %2259 = vmatpush1.msra.mxu0 0.0
    %2260 = vmatprep.subr.mxu0 0.0
    %2261 = vmatpush1.msra.mxu0 0.0
    %2262 = vmatprep.subr.mxu0 0.0
    %2263 = vmatpush1.msra.mxu0 0.0
    %2264 = vmatprep.subr.mxu0 0.0
    %2265 = vmatpush1.msra.mxu0 0.0
    %2266 = vmatprep.subr.mxu0 0.0
    %2267 = vmatpush1.msra.mxu0 0.0
    %2268 = vmatprep.subr.mxu0 0.0
    %2269 = vmatpush1.msra.mxu0 0.0
    %2270 = vmatprep.subr.mxu0 0.0
    %2271 = vmatpush1.msra.mxu0 0.0
    %2272 = vmatprep.subr.mxu0 0.0
    %2273 = vmatpush1.msra.mxu0 0.0
    %2274 = vmatprep.mubr.f32.mxu0 0.0
    %2275 = vmatmul.mubr.f32.gmra.mrb[0].mxu0 %v2208
    %v2276 = vpop.f32.mrb[0].mxu0
    %v2277 = vadd.f32 0.0, %v2276
    %v2278 = vpop.f32.mrb[0].mxu0
    %2279 = vdwg.mxu0
    %2281 = vrot.lane.b32.xlu0 %v2204, 64
    %v2282 = vpop.permute.xlu0 %2281
    %v2283 = vsel %vm187, %v2282, 0
    %2285 = vmatprep.subr.mxu0 0.0
    %2286 = vmatpush1.msra.mxu0 %v175
    %2287 = vmatprep.subr.mxu0 0.0
    %2288 = vmatpush1.msra.mxu0 %v376
    %2289 = vmatprep.subr.mxu0 0.0
    %2290 = vmatpush1.msra.mxu0 0.0
    %2291 = vmatprep.subr.mxu0 0.0
    %2292 = vmatpush1.msra.mxu0 0.0
    %2293 = vmatprep.subr.mxu0 0.0
    %2294 = vmatpush1.msra.mxu0 0.0
    %2295 = vmatprep.subr.mxu0 0.0
    %2296 = vmatpush1.msra.mxu0 0.0
    %2297 = vmatprep.subr.mxu0 0.0
    %2298 = vmatpush1.msra.mxu0 0.0
    %2299 = vmatprep.subr.mxu0 0.0
    %2300 = vmatpush1.msra.mxu0 0.0
    %2301 = vmatprep.subr.mxu0 0.0
    %2302 = vmatpush1.msra.mxu0 0.0
    %2303 = vmatprep.subr.mxu0 0.0
    %2304 = vmatpush1.msra.mxu0 0.0
    %2305 = vmatprep.subr.mxu0 0.0
    %2306 = vmatpush1.msra.mxu0 0.0
    %2307 = vmatprep.subr.mxu0 0.0
    %2308 = vmatpush1.msra.mxu0 0.0
    %2309 = vmatprep.subr.mxu0 0.0
    %2310 = vmatpush1.msra.mxu0 0.0
    %2311 = vmatprep.subr.mxu0 0.0
    %2312 = vmatpush1.msra.mxu0 0.0
    %2313 = vmatprep.subr.mxu0 0.0
    %2314 = vmatpush1.msra.mxu0 0.0
    %2315 = vmatprep.subr.mxu0 0.0
    %2316 = vmatpush1.msra.mxu0 0.0
    %2317 = vmatprep.subr.mxu0 0.0
    %2318 = vmatpush1.msra.mxu0 0.0
    %2319 = vmatprep.subr.mxu0 0.0
    %2320 = vmatpush1.msra.mxu0 0.0
    %2321 = vmatprep.subr.mxu0 0.0
    %2322 = vmatpush1.msra.mxu0 0.0
    %2323 = vmatprep.subr.mxu0 0.0
    %2324 = vmatpush1.msra.mxu0 0.0
    %2325 = vmatprep.subr.mxu0 0.0
    %2326 = vmatpush1.msra.mxu0 0.0
    %2327 = vmatprep.subr.mxu0 0.0
    %2328 = vmatpush1.msra.mxu0 0.0
    %2329 = vmatprep.subr.mxu0 0.0
    %2330 = vmatpush1.msra.mxu0 0.0
    %2331 = vmatprep.subr.mxu0 0.0
    %2332 = vmatpush1.msra.mxu0 0.0
    %2333 = vmatprep.subr.mxu0 0.0
    %2334 = vmatpush1.msra.mxu0 0.0
    %2335 = vmatprep.subr.mxu0 0.0
    %2336 = vmatpush1.msra.mxu0 0.0
    %2337 = vmatprep.subr.mxu0 0.0
    %2338 = vmatpush1.msra.mxu0 0.0
    %2339 = vmatprep.subr.mxu0 0.0
    %2340 = vmatpush1.msra.mxu0 0.0
    %2341 = vmatprep.subr.mxu0 0.0
    %2342 = vmatpush1.msra.mxu0 0.0
    %2343 = vmatprep.subr.mxu0 0.0
    %2344 = vmatpush1.msra.mxu0 0.0
    %2345 = vmatprep.subr.mxu0 0.0
    %2346 = vmatpush1.msra.mxu0 0.0
    %2347 = vmatprep.subr.mxu0 0.0
    %2348 = vmatpush1.msra.mxu0 0.0
    %2349 = vmatprep.mubr.f32.mxu0 0.0
    %2350 = vmatmul.mubr.f32.gmra.mrb[0].mxu0 %v2283
    %v2351 = vpop.f32.mrb[0].mxu0
    %v2352 = vadd.f32 %v2277, %v2351
    %v2353 = vpop.f32.mrb[0].mxu0
    %2354 = vdwg.mxu0
    %v2355 = vadd.f32 %v2352, %v452
    %v2356 = vxor.u32 %v2355, 2147483648
    %v2357 = vmul.f32 %v2356, 1.442695
    %v2358 = vpow.pop %v2357
    %v2359 = vadd.f32 %v2358, 1.0
    %v2360 = vrcp.pop %v2359
    %v2361 = vmul.f32 1.0, %v2360
    %v2362 = vtanh.pop %v2355
    %v2363 = vmul.f32 %v2361, %v2102
    %2365 = vrot.lane.b32.xlu0 %v2362, 32
    %v2366 = vpop.permute.xlu0 %2365
    %v2368 = vmul.f32 %v2361, %v2366
    %2370 = vrot.lane.b32.xlu0 %v2368, 32
    %v2371 = vpop.permute.xlu0 %2370
    %v2373 = vadd.f32 %v2363, %v2371
    %v2374 = vtanh.pop %v2373
    %2376 = vrot.lane.b32.xlu0 %v2374, 32
    %v2377 = vpop.permute.xlu0 %2376
    %v2379 = vmul.f32 %v2361, %v2377
    %v2380 = vld [vmem:[%s7] sm:$0xff]
    %v2381 = vld [vmem:[%s7 + $0x8] sm:$0xf]
    %v2382 = vld [vmem:[#allocation3] sm:$0x1]
    %v2384 = vlaneseq
    %v2385 = vshrl.u32 %v2384, 7
    %v2386 = vsub.s32 0, %v2385
    %v2387 = vrot.slane %v2382, %v2386
    %2390 = vrot.lane.b32.xlu0 %v2379, 64
    %v2391 = vpop.permute.xlu0 %2390
    %v2392 = vsel %vm187, %v2391, 0
    %v2395 = vsel %vm191, %v2381, 0
    %2397 = vmatprep.subr.mxu0 0.0
    %2398 = vmatpush1.msra.mxu0 %v2380
    %2399 = vmatprep.subr.mxu0 0.0
    %2400 = vmatpush1.msra.mxu0 %v2395
    %2401 = vmatprep.subr.mxu0 0.0
    %2402 = vmatpush1.msra.mxu0 0.0
    %2403 = vmatprep.subr.mxu0 0.0
    %2404 = vmatpush1.msra.mxu0 0.0
    %2405 = vmatprep.subr.mxu0 0.0
    %2406 = vmatpush1.msra.mxu0 0.0
    %2407 = vmatprep.subr.mxu0 0.0
    %2408 = vmatpush1.msra.mxu0 0.0
    %2409 = vmatprep.subr.mxu0 0.0
    %2410 = vmatpush1.msra.mxu0 0.0
    %2411 = vmatprep.subr.mxu0 0.0
    %2412 = vmatpush1.msra.mxu0 0.0
    %2413 = vmatprep.subr.mxu0 0.0
    %2414 = vmatpush1.msra.mxu0 0.0
    %2415 = vmatprep.subr.mxu0 0.0
    %2416 = vmatpush1.msra.mxu0 0.0
    %2417 = vmatprep.subr.mxu0 0.0
    %2418 = vmatpush1.msra.mxu0 0.0
    %2419 = vmatprep.subr.mxu0 0.0
    %2420 = vmatpush1.msra.mxu0 0.0
    %2421 = vmatprep.subr.mxu0 0.0
    %2422 = vmatpush1.msra.mxu0 0.0
    %2423 = vmatprep.subr.mxu0 0.0
    %2424 = vmatpush1.msra.mxu0 0.0
    %2425 = vmatprep.subr.mxu0 0.0
    %2426 = vmatpush1.msra.mxu0 0.0
    %2427 = vmatprep.subr.mxu0 0.0
    %2428 = vmatpush1.msra.mxu0 0.0
    %2429 = vmatprep.subr.mxu0 0.0
    %2430 = vmatpush1.msra.mxu0 0.0
    %2431 = vmatprep.subr.mxu0 0.0
    %2432 = vmatpush1.msra.mxu0 0.0
    %2433 = vmatprep.subr.mxu0 0.0
    %2434 = vmatpush1.msra.mxu0 0.0
    %2435 = vmatprep.subr.mxu0 0.0
    %2436 = vmatpush1.msra.mxu0 0.0
    %2437 = vmatprep.subr.mxu0 0.0
    %2438 = vmatpush1.msra.mxu0 0.0
    %2439 = vmatprep.subr.mxu0 0.0
    %2440 = vmatpush1.msra.mxu0 0.0
    %2441 = vmatprep.subr.mxu0 0.0
    %2442 = vmatpush1.msra.mxu0 0.0
    %2443 = vmatprep.subr.mxu0 0.0
    %2444 = vmatpush1.msra.mxu0 0.0
    %2445 = vmatprep.subr.mxu0 0.0
    %2446 = vmatpush1.msra.mxu0 0.0
    %2447 = vmatprep.subr.mxu0 0.0
    %2448 = vmatpush1.msra.mxu0 0.0
    %2449 = vmatprep.subr.mxu0 0.0
    %2450 = vmatpush1.msra.mxu0 0.0
    %2451 = vmatprep.subr.mxu0 0.0
    %2452 = vmatpush1.msra.mxu0 0.0
    %2453 = vmatprep.subr.mxu0 0.0
    %2454 = vmatpush1.msra.mxu0 0.0
    %2455 = vmatprep.subr.mxu0 0.0
    %2456 = vmatpush1.msra.mxu0 0.0
    %2457 = vmatprep.subr.mxu0 0.0
    %2458 = vmatpush1.msra.mxu0 0.0
    %2459 = vmatprep.subr.mxu0 0.0
    %2460 = vmatpush1.msra.mxu0 0.0
    %2461 = vmatprep.mubr.f32.mxu0 0.0
    %2462 = vmatmul.mubr.f32.gmra.mrb[0].mxu0 %v2392
    %v2463 = vpop.f32.mrb[0].mxu0
    %v2464 = vadd.f32 %v2387, %v2463
    %v2465 = vpop.f32.mrb[0].mxu0
    %2466 = vdwg.mxu0
    %vm2467 = vcmask 3072
    %2468 = vst.msk [vmem:[#allocation7] sm:$0xf] %vm2467, %v2464
    %2469 = vrot.lane.b32.xlu0 %v2204, 80
    %v2470 = vpop.permute.xlu0 %2469
    %vm2472 = vcmask 224384
    %2473 = vst.msk [vmem:[#allocation7] sm:$0xf] %vm2472, %v2470
    %2474 = vrot.lane.b32.xlu0 %v2379, 96
    %v2475 = vpop.permute.xlu0 %2474
    %vm2477 = vcmask 355584
    %2478 = vst.msk [vmem:[#allocation7] sm:$0xf] %vm2477, %v2475
    %2480 = vrot.lane.b32.xlu0 %v2198, 16
    %v2481 = vpop.permute.xlu0 %2480
    %vm2483 = vcmask 486784
    %2484 = vst.msk [vmem:[#allocation7] sm:$0xf] %vm2483, %v2481
    %2486 = vrot.lane.b32.xlu0 %v2373, 32
    %v2487 = vpop.permute.xlu0 %2486
    %vm2489 = vcmask 617984
    %2490 = vst.msk [vmem:[#allocation7] sm:$0xf] %vm2489, %v2487
    // Predicated region
    $region50: #{tpu_custom_call.1} parent=1 // pred_check
      _
    $region51: #{tpu_custom_call.1} parent=1 // pred_check_branch
      %2492 = sbr.rel (0) target = $region53
    $region52: #{tpu_custom_call.1} parent=1 // pred_region
      %s2494 = ssub.s32 64, 64
      %2495 = vsyncadd [#allocation6], %s2494
      %s2497 = sshll.u32 [#allocation7], 4
      %s2498 = int_to_ptr.vmem [resolvable:$true] %s2497
      %2500 = dma.vmem_to_hbm [thread:$0]  %s2498, 64, %s11, [#allocation6]
    $region53: #{tpu_custom_call.1} parent=1 // pred_fallthru
      _
    // Predicated region
    $region54: #{tpu_custom_call.1} parent=1 // pred_check
      _
    $region55: #{tpu_custom_call.1} parent=1 // pred_check_branch
      %2502 = sbr.rel (0) target = $region57
    $region56: #{tpu_custom_call.1} parent=1 // pred_region
      %2503 = dma.done [#allocation6], 64
    $region57: #{tpu_custom_call.1} parent=1 // pred_fallthru
      _
    %2504 = vsyncpa [#allocation5], 1
    %2505 = vsyncpa [#allocation6], 1

</llo_original>
